<compile_context>
chip_gen: v7x
topology: tpu7x:2x2x1
jax: 0.10.0
libtpu: 0.0.40
codegen_flags: <defaults>
</compile_context>

<pallas_src>
from functools import partial

import numpy as np
import jax
import jax.numpy as jnp
from jax import lax
from jax.experimental import pallas as pl
from jax.experimental.pallas import tpu as pltpu

B_IMG = 8  # images per grid step (multiple of 8 -> all row slices stay aligned)


# ----------------------------------------------------------------------------
# Fused Pallas kernel: B images per grid step, everything resident in VMEM.
# ----------------------------------------------------------------------------
def _net_kernel(xs1_ref, w1m_ref, b1_ref, w2m_ref, b2_ref,
                wf1_ref, bf1_ref, wf2_ref, bf2_ref, out_ref):
    f32 = jnp.float32
    B = out_ref.shape[0]                       # images in this grid step

    # ---- conv1: ONE banded MXU matmul (24B,160)@(160,256) ------------------
    # xs1 row = parity*12B + hh*B + b   (conv1 output row h1 = 2*hh + parity)
    # y1 col  = wpar*128 + wq*10 + c    (conv1 output col wo = 2*wq + wpar)
    y1 = jnp.dot(xs1_ref[...], w1m_ref[...],
                 preferred_element_type=f32) + b1_ref[...]          # (24B,256)

    # ---- max_pool2d(2) + relu, entirely on the VPU --------------------------
    yw = jnp.maximum(y1[:, :128], y1[:, 128:])                      # W-pool
    p1 = jnp.maximum(jnp.maximum(yw[:12 * B, :], yw[12 * B:, :]),   # H-pool
                     0.0)                                           # (12B,128)
    # p1 row = hh*B + b ; p1 lane = ww*10 + ci

    # ---- conv2: lane-concat 5 kh-shifted row blocks (aligned static slices),
    #      then ONE (8B,640)@(640,256) MXU matmul -----------------------------
    # TODO(synk): nn.Dropout2d is a no-op in eval mode (identity here).
    ps2 = jnp.concatenate([p1[kh * B:(kh + 8) * B, :] for kh in range(5)],
                          axis=1)                                   # (8B,640)
    y2 = jnp.dot(ps2, w2m_ref[...],
                 preferred_element_type=f32) + b2_ref[...]          # (8B,256)

    # ---- max_pool2d(2) + relu -----------------------------------------------
    yw2 = jnp.maximum(y2[:, :128], y2[:, 128:])                     # (8B,128)
    p2 = jnp.concatenate(
        [jnp.maximum(yw2[(2 * q) * B:(2 * q + 1) * B, :],
                     yw2[(2 * q + 1) * B:(2 * q + 2) * B, :])
         for q in range(4)], axis=1)                                # (B,512)
    p2 = jnp.maximum(p2, 0.0)
    # p2[b, hq*128 + wq*20 + co] = pooled conv2 feature (co, hq, wq) of image b

    # ---- fc1 + relu, fc2 (x.view(-1,320) C,H,W order folded into wf1) -------
    # TODO(synk): F.dropout(x, training=self.training) is identity in eval mode.
    h = jnp.maximum(jnp.dot(p2, wf1_ref[...],
                            preferred_element_type=f32) + bf1_ref[...], 0.0)
    logits = jnp.dot(h, wf2_ref[...],
                     preferred_element_type=f32) + bf2_ref[...]     # (B,128)

    # ---- log_softmax over the 10 valid lanes (pad lanes carry bias=-1e30) ---
    m = jnp.max(logits, axis=-1, keepdims=True)
    s = logits - m
    lse = jnp.log(jnp.sum(jnp.exp(s), axis=-1, keepdims=True))
    out_ref[...] = s - lse


# ----------------------------------------------------------------------------
# Host-side weight packing (pure layout plumbing, run ONCE, not per forward).
# ----------------------------------------------------------------------------
def pack_params(p):
    w1 = np.asarray(p["conv1_w"], np.float32)   # (10, 1, 5, 5)
    b1 = np.asarray(p["conv1_b"], np.float32)   # (10,)
    w2 = np.asarray(p["conv2_w"], np.float32)   # (20, 10, 5, 5)
    b2 = np.asarray(p["conv2_b"], np.float32)   # (20,)
    f1w = np.asarray(p["fc1_w"], np.float32)    # (50, 320)
    f1b = np.asarray(p["fc1_b"], np.float32)    # (50,)
    f2w = np.asarray(p["fc2_w"], np.float32)    # (10, 50)
    f2b = np.asarray(p["fc2_b"], np.float32)    # (10,)

    # conv1 merged banded weights:
    #   w1m[kh*32 + (wo+kw), wpar*128 + wq*10 + c] = w1[c,0,kh,kw], wo = 2wq+wpar
    w1m = np.zeros((160, 256), np.float32)
    b1p = np.zeros((1, 256), np.float32)
    for wq in range(12):
        for wpar in range(2):
            wo = 2 * wq + wpar
            col = wpar * 128 + wq * 10
            b1p[0, col:col + 10] = b1
            for kh in range(5):
                for kw in range(5):
                    w1m[kh * 32 + wo + kw, col:col + 10] = w1[:, 0, kh, kw]

    # conv2 merged banded weights (input lane = ww*10 + ci, ww = wo2 + kw):
    #   w2m[kh*128 + (wo2+kw)*10 + ci, wpar*128 + wq2*20 + co] = w2[co,ci,kh,kw]
    w2m = np.zeros((640, 256), np.float32)
    b2p = np.zeros((1, 256), np.float32)
    for wq2 in range(4):
        for wpar in range(2):
            wo2 = 2 * wq2 + wpar
            col = wpar * 128 + wq2 * 20
            b2p[0, col:col + 20] = b2
            for kh in range(5):
                for kw in range(5):
                    row = kh * 128 + (wo2 + kw) * 10
                    w2m[row:row + 10, col:col + 20] = w2[:, :, kh, kw].T

    # fc1: p2 lane = hq*128 + wq*20 + co ; PyTorch flat index = co*16 + hq*4 + wq
    wf1 = np.zeros((512, 128), np.float32)
    for hq in range(4):
        for wq in range(4):
            for co in range(20):
                wf1[hq * 128 + wq * 20 + co, :50] = f1w[:, co * 16 + hq * 4 + wq]
    bf1 = np.zeros((1, 128), np.float32)
    bf1[0, :50] = f1b

    # fc2: pad output lanes with a huge-negative bias so log_softmax ignores them
    wf2 = np.zeros((128, 128), np.float32)
    wf2[:50, :10] = f2w.T
    bf2 = np.full((1, 128), -1e30, np.float32)
    bf2[0, :10] = f2b

    packed = (w1m, b1p, w2m, b2p, wf1, bf1, wf2, bf2)
    return tuple(jnp.asarray(a) for a in packed)


# ----------------------------------------------------------------------------
# Full forward pass (eval mode), jitted; packed weights are passed in.
# ----------------------------------------------------------------------------
@partial(jax.jit, static_argnames=("block_b",))
def net_forward(x_nchw, packed, block_b=B_IMG):
    assert block_b % 8 == 0
    n = x_nchw.shape[0]
    g = -(-n // block_b)
    n_pad = g * block_b

    x2 = x_nchw[:, 0, :, :].astype(jnp.float32)                    # (n,28,28)
    if n_pad != n:
        x2 = jnp.pad(x2, ((0, n_pad - n), (0, 0), (0, 0)))
    xw = jnp.pad(x2, ((0, 0), (0, 0), (0, 4)))                     # (n_pad,28,32)

    # conv1 im2col slab (layout plumbing only):
    #   row  = chunk*24B + parity*12B + hh*B + b   (conv1 row h1 = 2*hh+parity)
    #   lane = kh*32 + w,  value = image[b][h1 + kh, w]
    cols = jnp.concatenate([xw[:, kh:kh + 24, :] for kh in range(5)], axis=-1)
    cols = cols.reshape(g, block_b, 12, 2, 160).transpose(0, 3, 2, 1, 4)
    xs1 = cols.reshape(g * 24 * block_b, 160)

    (w1m, b1p, w2m, b2p, wf1, bf1, wf2, bf2) = packed

    def const_spec(shape):
        # Weight blocks never change across the grid -> single buffer.
        return pl.BlockSpec(shape, lambda i: (0,) * len(shape),
                            pipeline_mode=pl.Buffered(1))

    out = pl.pallas_call(
        _net_kernel,
        out_shape=jax.ShapeDtypeStruct((n_pad, 128), jnp.float32),
        grid=(g,),
        in_specs=[
            pl.BlockSpec((24 * block_b, 160), lambda i: (i, 0)),   # image slab
            const_spec((160, 256)),   # conv1 merged banded weights
            const_spec((1, 256)),     # conv1 bias row
            const_spec((640, 256)),   # conv2 merged banded weights
            const_spec((1, 256)),     # conv2 bias row
            const_spec((512, 128)),   # fc1 packed weights
            const_spec((1, 128)),     # fc1 bias
            const_spec((128, 128)),   # fc2 packed weights
            const_spec((1, 128)),     # fc2 bias (pad lanes = -1e30)
        ],
        out_specs=pl.BlockSpec((block_b, 128), lambda i: (i, 0)),
        compiler_params=pltpu.CompilerParams(
            dimension_semantics=("parallel",)),
    )(xs1, w1m, b1p, w2m, b2p, wf1, bf1, wf2, bf2)

    return out[:n, :10]


# ----------------------------------------------------------------------------
# Pure-JAX reference (for the correctness check)
# ----------------------------------------------------------------------------
def ref_forward(x, p):
    hp = lax.Precision.HIGHEST
    y = lax.conv_general_dilated(
        x, p["conv1_w"], (1, 1), "VALID",
        dimension_numbers=("NCHW", "OIHW", "NCHW"), precision=hp,
    ) + p["conv1_b"][None, :, None, None]
    y = lax.reduce_window(y, -jnp.inf, lax.max, (1, 1, 2, 2), (1, 1, 2, 2), "VALID")
    y = jnp.maximum(y, 0.0)
    y = lax.conv_general_dilated(
        y, p["conv2_w"], (1, 1), "VALID",
        dimension_numbers=("NCHW", "OIHW", "NCHW"), precision=hp,
    ) + p["conv2_b"][None, :, None, None]
    y = lax.reduce_window(y, -jnp.inf, lax.max, (1, 1, 2, 2), (1, 1, 2, 2), "VALID")
    y = jnp.maximum(y, 0.0)
    y = y.reshape(y.shape[0], -1)
    y = jnp.maximum(jnp.dot(y, p["fc1_w"].T, precision=hp) + p["fc1_b"], 0.0)
    y = jnp.dot(y, p["fc2_w"].T, precision=hp) + p["fc2_b"]
    return jax.nn.log_softmax(y, axis=1)


# ----------------------------------------------------------------------------
# Main
# ----------------------------------------------------------------------------
if __name__ == "__main__":
    # Deterministic parameters (shapes from Net.__init__).
    pkey = jax.random.PRNGKey(42)
    ks = jax.random.split(pkey, 8)
    params = {
        "conv1_w": 0.2 * jax.random.normal(ks[0], (10, 1, 5, 5), jnp.float32),
        "conv1_b": 0.1 * jax.random.normal(ks[1], (10,), jnp.float32),
        "conv2_w": 0.1 * jax.random.normal(ks[2], (20, 10, 5, 5), jnp.float32),
        "conv2_b": 0.1 * jax.random.normal(ks[3], (20,), jnp.float32),
        "fc1_w": 0.05 * jax.random.normal(ks[4], (50, 320), jnp.float32),
        "fc1_b": 0.1 * jax.random.normal(ks[5], (50,), jnp.float32),
        "fc2_w": 0.1 * jax.random.normal(ks[6], (10, 50), jnp.float32),
        "fc2_b": 0.1 * jax.random.normal(ks[7], (10,), jnp.float32),
    }

    # MNIST-sized input (fc1 in_features=320 fixes spatial size to 28x28).
    # 16 images -> 2 grid steps of 8, so both v7x TensorCores get work.
    x = jax.random.normal(jax.random.PRNGKey(0), (16, 1, 28, 28), jnp.float32)

    packed = pack_params(params)        # host-side packing, done ONCE

    out = jax.block_until_ready(net_forward(x, packed))
    ref = jax.block_until_ready(ref_forward(x, params))

    assert out.shape == (16, 10) and out.dtype == jnp.float32
    assert jnp.allclose(out, ref, atol=2e-3, rtol=2e-3), (
        f"max abs diff {jnp.max(jnp.abs(out - ref))}"
    )
    print("KERNEL_OK")
</pallas_src>

<mosaic_0001>
module attributes {stable_mosaic.version = 11 : i64} {
  func.func @_net_kernel(%arg0: i32, %arg1: memref<192x160xf32, #tpu.memory_space<vmem>>, %arg2: memref<160x256xf32, #tpu.memory_space<vmem>>, %arg3: memref<1x256xf32, #tpu.memory_space<vmem>>, %arg4: memref<640x256xf32, #tpu.memory_space<vmem>>, %arg5: memref<1x256xf32, #tpu.memory_space<vmem>>, %arg6: memref<512x128xf32, #tpu.memory_space<vmem>>, %arg7: memref<1x128xf32, #tpu.memory_space<vmem>>, %arg8: memref<128x128xf32, #tpu.memory_space<vmem>>, %arg9: memref<1x128xf32, #tpu.memory_space<vmem>>, %arg10: memref<8x128xf32, #tpu.memory_space<vmem>>) attributes {dimension_semantics = [#tpu.dimension_semantics<parallel>], iteration_bounds = array<i64: 2>, scalar_prefetch = 0 : i64, scratch_operands = 0 : i64, tpu.core_type = #tpu.core_type<tc>, window_params = [{transform_indices = @transform_0, window_bounds = array<i64: 192, 160>}, {pipeline_mode = #tpu.pipeline_mode<synchronous>, transform_indices = @transform_1, window_bounds = array<i64: 160, 256>}, {pipeline_mode = #tpu.pipeline_mode<synchronous>, transform_indices = @transform_2, window_bounds = array<i64: 1, 256>}, {pipeline_mode = #tpu.pipeline_mode<synchronous>, transform_indices = @transform_3, window_bounds = array<i64: 640, 256>}, {pipeline_mode = #tpu.pipeline_mode<synchronous>, transform_indices = @transform_4, window_bounds = array<i64: 1, 256>}, {pipeline_mode = #tpu.pipeline_mode<synchronous>, transform_indices = @transform_5, window_bounds = array<i64: 512, 128>}, {pipeline_mode = #tpu.pipeline_mode<synchronous>, transform_indices = @transform_6, window_bounds = array<i64: 1, 128>}, {pipeline_mode = #tpu.pipeline_mode<synchronous>, transform_indices = @transform_7, window_bounds = array<i64: 128, 128>}, {pipeline_mode = #tpu.pipeline_mode<synchronous>, transform_indices = @transform_8, window_bounds = array<i64: 1, 128>}, {transform_indices = @transform_9, window_bounds = array<i64: 8, 128>}]} {
    %c0 = arith.constant 0 : index
    %c0_0 = arith.constant 0 : index
    %0 = vector.load %arg1[%c0, %c0_0] : memref<192x160xf32, #tpu.memory_space<vmem>>, vector<192x160xf32>
    %c0_1 = arith.constant 0 : index
    %c0_2 = arith.constant 0 : index
    %1 = vector.load %arg2[%c0_1, %c0_2] : memref<160x256xf32, #tpu.memory_space<vmem>>, vector<160x256xf32>
    %cst = arith.constant dense<0.000000e+00> : vector<192x256xf32>
    %2 = tpu.matmul %0, %1, %cst {dimension_numbers = #tpu.dot_dimension_numbers<[1], [0], [0], [1], [0, 0, 1, 1], [], []>} : vector<192x160xf32>, vector<160x256xf32>, vector<192x256xf32> -> vector<192x256xf32>
    %c0_3 = arith.constant 0 : index
    %c0_4 = arith.constant 0 : index
    %3 = vector.load %arg3[%c0_3, %c0_4] : memref<1x256xf32, #tpu.memory_space<vmem>>, vector<1x256xf32>
    %4 = vector.broadcast %3 : vector<1x256xf32> to vector<192x256xf32>
    %5 = arith.addf %2, %4 : vector<192x256xf32>
    %6 = vector.extract_strided_slice %5 {offsets = [0, 0], sizes = [192, 128], strides = [1, 1]} : vector<192x256xf32> to vector<192x128xf32>
    %7 = vector.extract_strided_slice %5 {offsets = [0, 128], sizes = [192, 128], strides = [1, 1]} : vector<192x256xf32> to vector<192x128xf32>
    %8 = arith.maximumf %6, %7 : vector<192x128xf32>
    %9 = vector.extract_strided_slice %8 {offsets = [0, 0], sizes = [96, 128], strides = [1, 1]} : vector<192x128xf32> to vector<96x128xf32>
    %10 = vector.extract_strided_slice %8 {offsets = [96, 0], sizes = [96, 128], strides = [1, 1]} : vector<192x128xf32> to vector<96x128xf32>
    %11 = arith.maximumf %9, %10 : vector<96x128xf32>
    %cst_5 = arith.constant 0.000000e+00 : f32
    %12 = vector.broadcast %cst_5 : f32 to vector<96x128xf32>
    %13 = arith.maximumf %11, %12 : vector<96x128xf32>
    %14 = vector.extract_strided_slice %13 {offsets = [0, 0], sizes = [64, 128], strides = [1, 1]} : vector<96x128xf32> to vector<64x128xf32>
    %15 = vector.extract_strided_slice %13 {offsets = [8, 0], sizes = [64, 128], strides = [1, 1]} : vector<96x128xf32> to vector<64x128xf32>
    %16 = vector.extract_strided_slice %13 {offsets = [16, 0], sizes = [64, 128], strides = [1, 1]} : vector<96x128xf32> to vector<64x128xf32>
    %17 = vector.extract_strided_slice %13 {offsets = [24, 0], sizes = [64, 128], strides = [1, 1]} : vector<96x128xf32> to vector<64x128xf32>
    %18 = vector.extract_strided_slice %13 {offsets = [32, 0], sizes = [64, 128], strides = [1, 1]} : vector<96x128xf32> to vector<64x128xf32>
    %19 = tpu.concatenate %14, %15, %16, %17, %18 in 1 : vector<64x128xf32>, vector<64x128xf32>, vector<64x128xf32>, vector<64x128xf32>, vector<64x128xf32> -> vector<64x640xf32>
    %c0_6 = arith.constant 0 : index
    %c0_7 = arith.constant 0 : index
    %20 = vector.load %arg4[%c0_6, %c0_7] : memref<640x256xf32, #tpu.memory_space<vmem>>, vector<640x256xf32>
    %cst_8 = arith.constant dense<0.000000e+00> : vector<64x256xf32>
    %21 = tpu.matmul %19, %20, %cst_8 {dimension_numbers = #tpu.dot_dimension_numbers<[1], [0], [0], [1], [0, 0, 1, 1], [], []>} : vector<64x640xf32>, vector<640x256xf32>, vector<64x256xf32> -> vector<64x256xf32>
    %c0_9 = arith.constant 0 : index
    %c0_10 = arith.constant 0 : index
    %22 = vector.load %arg5[%c0_9, %c0_10] : memref<1x256xf32, #tpu.memory_space<vmem>>, vector<1x256xf32>
    %23 = vector.broadcast %22 : vector<1x256xf32> to vector<64x256xf32>
    %24 = arith.addf %21, %23 : vector<64x256xf32>
    %25 = vector.extract_strided_slice %24 {offsets = [0, 0], sizes = [64, 128], strides = [1, 1]} : vector<64x256xf32> to vector<64x128xf32>
    %26 = vector.extract_strided_slice %24 {offsets = [0, 128], sizes = [64, 128], strides = [1, 1]} : vector<64x256xf32> to vector<64x128xf32>
    %27 = arith.maximumf %25, %26 : vector<64x128xf32>
    %28 = vector.extract_strided_slice %27 {offsets = [0, 0], sizes = [8, 128], strides = [1, 1]} : vector<64x128xf32> to vector<8x128xf32>
    %29 = vector.extract_strided_slice %27 {offsets = [8, 0], sizes = [8, 128], strides = [1, 1]} : vector<64x128xf32> to vector<8x128xf32>
    %30 = arith.maximumf %28, %29 : vector<8x128xf32>
    %31 = vector.extract_strided_slice %27 {offsets = [16, 0], sizes = [8, 128], strides = [1, 1]} : vector<64x128xf32> to vector<8x128xf32>
    %32 = vector.extract_strided_slice %27 {offsets = [24, 0], sizes = [8, 128], strides = [1, 1]} : vector<64x128xf32> to vector<8x128xf32>
    %33 = arith.maximumf %31, %32 : vector<8x128xf32>
    %34 = vector.extract_strided_slice %27 {offsets = [32, 0], sizes = [8, 128], strides = [1, 1]} : vector<64x128xf32> to vector<8x128xf32>
    %35 = vector.extract_strided_slice %27 {offsets = [40, 0], sizes = [8, 128], strides = [1, 1]} : vector<64x128xf32> to vector<8x128xf32>
    %36 = arith.maximumf %34, %35 : vector<8x128xf32>
    %37 = vector.extract_strided_slice %27 {offsets = [48, 0], sizes = [8, 128], strides = [1, 1]} : vector<64x128xf32> to vector<8x128xf32>
    %38 = vector.extract_strided_slice %27 {offsets = [56, 0], sizes = [8, 128], strides = [1, 1]} : vector<64x128xf32> to vector<8x128xf32>
    %39 = arith.maximumf %37, %38 : vector<8x128xf32>
    %40 = tpu.concatenate %30, %33, %36, %39 in 1 : vector<8x128xf32>, vector<8x128xf32>, vector<8x128xf32>, vector<8x128xf32> -> vector<8x512xf32>
    %cst_11 = arith.constant 0.000000e+00 : f32
    %41 = vector.broadcast %cst_11 : f32 to vector<8x512xf32>
    %42 = arith.maximumf %40, %41 : vector<8x512xf32>
    %c0_12 = arith.constant 0 : index
    %c0_13 = arith.constant 0 : index
    %43 = vector.load %arg6[%c0_12, %c0_13] : memref<512x128xf32, #tpu.memory_space<vmem>>, vector<512x128xf32>
    %cst_14 = arith.constant dense<0.000000e+00> : vector<8x128xf32>
    %44 = tpu.matmul %42, %43, %cst_14 {dimension_numbers = #tpu.dot_dimension_numbers<[1], [0], [0], [1], [0, 0, 1, 1], [], []>} : vector<8x512xf32>, vector<512x128xf32>, vector<8x128xf32> -> vector<8x128xf32>
    %c0_15 = arith.constant 0 : index
    %c0_16 = arith.constant 0 : index
    %45 = vector.load %arg7[%c0_15, %c0_16] : memref<1x128xf32, #tpu.memory_space<vmem>>, vector<1x128xf32>
    %46 = vector.broadcast %45 : vector<1x128xf32> to vector<8x128xf32>
    %47 = arith.addf %44, %46 : vector<8x128xf32>
    %cst_17 = arith.constant 0.000000e+00 : f32
    %48 = vector.broadcast %cst_17 : f32 to vector<8x128xf32>
    %49 = arith.maximumf %47, %48 : vector<8x128xf32>
    %c0_18 = arith.constant 0 : index
    %c0_19 = arith.constant 0 : index
    %50 = vector.load %arg8[%c0_18, %c0_19] : memref<128x128xf32, #tpu.memory_space<vmem>>, vector<128x128xf32>
    %cst_20 = arith.constant dense<0.000000e+00> : vector<8x128xf32>
    %51 = tpu.matmul %49, %50, %cst_20 {dimension_numbers = #tpu.dot_dimension_numbers<[1], [0], [0], [1], [0, 0, 1, 1], [], []>} : vector<8x128xf32>, vector<128x128xf32>, vector<8x128xf32> -> vector<8x128xf32>
    %c0_21 = arith.constant 0 : index
    %c0_22 = arith.constant 0 : index
    %52 = vector.load %arg9[%c0_21, %c0_22] : memref<1x128xf32, #tpu.memory_space<vmem>>, vector<1x128xf32>
    %53 = vector.broadcast %52 : vector<1x128xf32> to vector<8x128xf32>
    %54 = arith.addf %51, %53 : vector<8x128xf32>
    %cst_23 = arith.constant dense<0xFF800000> : vector<8xf32>
    %55 = vector.multi_reduction <maximumf>, %54, %cst_23 [1] : vector<8x128xf32> to vector<8xf32>
    %56 = vector.shape_cast %55 : vector<8xf32> to vector<8x1xf32>
    %57 = vector.broadcast %56 : vector<8x1xf32> to vector<8x128xf32>
    %58 = arith.subf %54, %57 : vector<8x128xf32>
    %59 = math.exp %58 : vector<8x128xf32>
    %cst_24 = arith.constant dense<0.000000e+00> : vector<8xf32>
    %60 = vector.multi_reduction <add>, %59, %cst_24 [1] : vector<8x128xf32> to vector<8xf32>
    %61 = vector.shape_cast %60 : vector<8xf32> to vector<8x1xf32>
    %62 = math.log %61 : vector<8x1xf32>
    %63 = vector.broadcast %62 : vector<8x1xf32> to vector<8x128xf32>
    %64 = arith.subf %58, %63 : vector<8x128xf32>
    %c0_25 = arith.constant 0 : index
    %c0_26 = arith.constant 0 : index
    %65 = vector.load %arg10[%c0_25, %c0_26] : memref<8x128xf32, #tpu.memory_space<vmem>>, vector<8x128xf32>
    tpu.vector_store %arg10[%c0_25, %c0_26], %64 {strides = array<i32>} : memref<8x128xf32, #tpu.memory_space<vmem>>, vector<8x128xf32>,
    return
  }
  func.func @transform_0(%arg0: i32) -> (i32, i32) {
    %c0_i32 = arith.constant 0 : i32
    %c0_i32_0 = arith.constant 0 : i32
    return %arg0, %c0_i32 : i32, i32
  }
  func.func @transform_1(%arg0: i32) -> (i32, i32) {
    %c0_i32 = arith.constant 0 : i32
    %c0_i32_0 = arith.constant 0 : i32
    %c0_i32_1 = arith.constant 0 : i32
    return %c0_i32, %c0_i32_0 : i32, i32
  }
  func.func @transform_2(%arg0: i32) -> (i32, i32) {
    %c0_i32 = arith.constant 0 : i32
    %c0_i32_0 = arith.constant 0 : i32
    %c0_i32_1 = arith.constant 0 : i32
    return %c0_i32, %c0_i32_0 : i32, i32
  }
  func.func @transform_3(%arg0: i32) -> (i32, i32) {
    %c0_i32 = arith.constant 0 : i32
    %c0_i32_0 = arith.constant 0 : i32
    %c0_i32_1 = arith.constant 0 : i32
    return %c0_i32, %c0_i32_0 : i32, i32
  }
  func.func @transform_4(%arg0: i32) -> (i32, i32) {
    %c0_i32 = arith.constant 0 : i32
    %c0_i32_0 = arith.constant 0 : i32
    %c0_i32_1 = arith.constant 0 : i32
    return %c0_i32, %c0_i32_0 : i32, i32
  }
  func.func @transform_5(%arg0: i32) -> (i32, i32) {
    %c0_i32 = arith.constant 0 : i32
    %c0_i32_0 = arith.constant 0 : i32
    %c0_i32_1 = arith.constant 0 : i32
    return %c0_i32, %c0_i32_0 : i32, i32
  }
  func.func @transform_6(%arg0: i32) -> (i32, i32) {
    %c0_i32 = arith.constant 0 : i32
    %c0_i32_0 = arith.constant 0 : i32
    %c0_i32_1 = arith.constant 0 : i32
    return %c0_i32, %c0_i32_0 : i32, i32
  }
  func.func @transform_7(%arg0: i32) -> (i32, i32) {
    %c0_i32 = arith.constant 0 : i32
    %c0_i32_0 = arith.constant 0 : i32
    %c0_i32_1 = arith.constant 0 : i32
    return %c0_i32, %c0_i32_0 : i32, i32
  }
  func.func @transform_8(%arg0: i32) -> (i32, i32) {
    %c0_i32 = arith.constant 0 : i32
    %c0_i32_0 = arith.constant 0 : i32
    %c0_i32_1 = arith.constant 0 : i32
    return %c0_i32, %c0_i32_0 : i32, i32
  }
  func.func @transform_9(%arg0: i32) -> (i32, i32) {
    %c0_i32 = arith.constant 0 : i32
    %c0_i32_0 = arith.constant 0 : i32
    return %arg0, %c0_i32 : i32, i32
  }
}

</mosaic_0001>

<llo_original>
// kernel: net_forward.1
$region0: #{net_forward.1}
  #allocation0 [shape = 'u32[]', space=smem, size = 0x4, offset = 0x4, fixed_abs, tag = 'smem constant byte address 0x4 - core index']
  #allocation1 [shape = 'u32[144,128]{1,0:T(1,128)}', space=vmem, size = 0x12000, scoped, tag = 'internal scratch']
  %s0 = inlined_call_operand.vmem [shape: f32[384,160], index: 0, kind: input, shape index: {}]
  %s1 = inlined_call_operand.vmem [shape: f32[160,256], index: 1, kind: input, shape index: {}]
  %s2 = inlined_call_operand.vmem [shape: f32[1,256], index: 2, kind: input, shape index: {}]
  %s3 = inlined_call_operand.vmem [shape: f32[640,256], index: 3, kind: input, shape index: {}]
  %s4 = inlined_call_operand.vmem [shape: f32[1,256], index: 4, kind: input, shape index: {}]
  %s5 = inlined_call_operand.vmem [shape: f32[512,128], index: 5, kind: input, shape index: {}]
  %s6 = inlined_call_operand.vmem [shape: f32[1,128], index: 6, kind: input, shape index: {}]
  %s7 = inlined_call_operand.vmem [shape: f32[128,128], index: 7, kind: input, shape index: {}]
  %s8 = inlined_call_operand.vmem [shape: f32[1,128], index: 8, kind: input, shape index: {}]
  %s9 = inlined_call_operand.hbm [shape: f32[16,128], index: 9, kind: output, shape index: {}]
  %s10 = sld [smem:[#allocation0]]
  $region69: #{net_forward.1} parent=0
    _
  %s12 = ssub.s32 1, %s10
  %s13 = scalar_select 0, %s12, %s10
  $region1: #{net_forward.1} parent=0
    #allocation2 [shape = 'u8[8192]{0}', space=vmem, size = 0x2000, scoped, tag = 'output window, operand 0']
    #allocation3 [shape = 's32[2]{0}', space=sflag, size = 0x8, scoped, tag = 'scoped memory for net_forward.1']
    %14 = vsyncpa [#allocation3], 0
    %s15 = scalar_lea.sflag [#allocation3], 1
    %16 = vsyncpa %s15, 0
    loop: start=0, step=1, limit=4
    $region2: #{net_forward.1} parent=1 // loop_pre_header
      _
    $region3: #{net_forward.1} parent=1 // loop_header
      %s18 = sphi 0, %s22
      %p19 = scmp.ge.s32.totalorder %s18, 4
      %s28 = sphi 0, %s30
      %s31 = sphi 0, %s28
      %s32 = sphi 0, %s31
      %s48 = sphi 0, %s32
      %s52 = sphi 0, %s52
      %s54 = sphi 0, %s52
      %s55 = sphi 0, %s54
      %s69 = sphi 0, %s55
      %s73 = sphi 0, %s73
      %s75 = sphi 0, %s73
      %s76 = sphi 0, %s75
      %s90 = sphi 0, %s76
      %s94 = sphi 0, %s94
      %s96 = sphi 0, %s94
      %s97 = sphi 0, %s96
      %s111 = sphi 0, %s97
      %s115 = sphi 0, %s115
      %s117 = sphi 0, %s115
      %s118 = sphi 0, %s117
      %s132 = sphi 0, %s118
      %s136 = sphi 0, %s136
      %s138 = sphi 0, %s136
      %s139 = sphi 0, %s138
      %s153 = sphi 0, %s139
      %s157 = sphi 0, %s157
      %s159 = sphi 0, %s157
      %s160 = sphi 0, %s159
      %s174 = sphi 0, %s160
      %s178 = sphi 0, %s178
      %s180 = sphi 0, %s178
      %s181 = sphi 0, %s180
      %s195 = sphi 0, %s181
      %s199 = sphi 0, %s199
      %s201 = sphi 0, %s199
      %s202 = sphi 0, %s201
      %s216 = sphi 0, %s202
      %s222 = sphi 0, %s224
      %s225 = sphi 0, %s222
      %s226 = sphi 0, %s225
      %s242 = sphi 0, %s226
    $region4: #{net_forward.1} parent=1 // loop_header_branch
      %21 = sbr.rel (%p19) target = $region8
    $region5: #{net_forward.1} parent=1 // loop_body
      %s23 = ssub.s32 %s18, 1
      %s24 = ssub.s32 %s18, 2
      %s25 = sadd.s32 %s18, 1
      %s26 = ssub.s32 %s18, %s25
      %p27 = scmp.eq.s32.totalorder %s26, 0
      %s29 = sadd.s32 %s28, 1
      %s30 = scalar_select %p27, %s28, %s29
      %p33 = pneg %p27
      %p34 = scmp.eq.s32.totalorder %s18, 1
      %p35 = por %p33, %p34
      %p36 = scmp.ne.s32.totalorder %s28, %s31
      %p37 = scmp.eq.s32.totalorder %s18, 0
      %p38 = por %p36, %p37
      %p39 = scmp.ne.s32.totalorder %s28, %s31
      %p40 = scmp.eq.s32.totalorder %s23, 1
      %p41 = por %p39, %p40
      %p42 = scmp.ne.s32.totalorder %s31, %s32
      %p43 = scmp.eq.s32.totalorder %s23, 0
      %p44 = por %p42, %p43
      %p45 = scmp.ne.s32.totalorder %s31, %s32
      %p46 = scmp.eq.s32.totalorder %s24, 1
      %p47 = por %p45, %p46
      %p49 = scmp.ne.s32.totalorder %s32, %s48
      %p50 = scmp.eq.s32.totalorder %s24, 0
      %p51 = por %p49, %p50
      %s53 = sadd.s32 %s52, 1
      %p56 = scmp.eq.s32.totalorder %s18, 1
      %p57 = scmp.ne.s32.totalorder %s52, %s54
      %p58 = scmp.eq.s32.totalorder %s18, 0
      %p59 = por %p57, %p58
      %p60 = scmp.ne.s32.totalorder %s52, %s54
      %p61 = scmp.eq.s32.totalorder %s23, 1
      %p62 = por %p60, %p61
      %p63 = scmp.ne.s32.totalorder %s54, %s55
      %p64 = scmp.eq.s32.totalorder %s23, 0
      %p65 = por %p63, %p64
      %p66 = scmp.ne.s32.totalorder %s54, %s55
      %p67 = scmp.eq.s32.totalorder %s24, 1
      %p68 = por %p66, %p67
      %p70 = scmp.ne.s32.totalorder %s55, %s69
      %p71 = scmp.eq.s32.totalorder %s24, 0
      %p72 = por %p70, %p71
      %s74 = sadd.s32 %s73, 1
      %p77 = scmp.eq.s32.totalorder %s18, 1
      %p78 = scmp.ne.s32.totalorder %s73, %s75
      %p79 = scmp.eq.s32.totalorder %s18, 0
      %p80 = por %p78, %p79
      %p81 = scmp.ne.s32.totalorder %s73, %s75
      %p82 = scmp.eq.s32.totalorder %s23, 1
      %p83 = por %p81, %p82
      %p84 = scmp.ne.s32.totalorder %s75, %s76
      %p85 = scmp.eq.s32.totalorder %s23, 0
      %p86 = por %p84, %p85
      %p87 = scmp.ne.s32.totalorder %s75, %s76
      %p88 = scmp.eq.s32.totalorder %s24, 1
      %p89 = por %p87, %p88
      %p91 = scmp.ne.s32.totalorder %s76, %s90
      %p92 = scmp.eq.s32.totalorder %s24, 0
      %p93 = por %p91, %p92
      %s95 = sadd.s32 %s94, 1
      %p98 = scmp.eq.s32.totalorder %s18, 1
      %p99 = scmp.ne.s32.totalorder %s94, %s96
      %p100 = scmp.eq.s32.totalorder %s18, 0
      %p101 = por %p99, %p100
      %p102 = scmp.ne.s32.totalorder %s94, %s96
      %p103 = scmp.eq.s32.totalorder %s23, 1
      %p104 = por %p102, %p103
      %p105 = scmp.ne.s32.totalorder %s96, %s97
      %p106 = scmp.eq.s32.totalorder %s23, 0
      %p107 = por %p105, %p106
      %p108 = scmp.ne.s32.totalorder %s96, %s97
      %p109 = scmp.eq.s32.totalorder %s24, 1
      %p110 = por %p108, %p109
      %p112 = scmp.ne.s32.totalorder %s97, %s111
      %p113 = scmp.eq.s32.totalorder %s24, 0
      %p114 = por %p112, %p113
      %s116 = sadd.s32 %s115, 1
      %p119 = scmp.eq.s32.totalorder %s18, 1
      %p120 = scmp.ne.s32.totalorder %s115, %s117
      %p121 = scmp.eq.s32.totalorder %s18, 0
      %p122 = por %p120, %p121
      %p123 = scmp.ne.s32.totalorder %s115, %s117
      %p124 = scmp.eq.s32.totalorder %s23, 1
      %p125 = por %p123, %p124
      %p126 = scmp.ne.s32.totalorder %s117, %s118
      %p127 = scmp.eq.s32.totalorder %s23, 0
      %p128 = por %p126, %p127
      %p129 = scmp.ne.s32.totalorder %s117, %s118
      %p130 = scmp.eq.s32.totalorder %s24, 1
      %p131 = por %p129, %p130
      %p133 = scmp.ne.s32.totalorder %s118, %s132
      %p134 = scmp.eq.s32.totalorder %s24, 0
      %p135 = por %p133, %p134
      %s137 = sadd.s32 %s136, 1
      %p140 = scmp.eq.s32.totalorder %s18, 1
      %p141 = scmp.ne.s32.totalorder %s136, %s138
      %p142 = scmp.eq.s32.totalorder %s18, 0
      %p143 = por %p141, %p142
      %p144 = scmp.ne.s32.totalorder %s136, %s138
      %p145 = scmp.eq.s32.totalorder %s23, 1
      %p146 = por %p144, %p145
      %p147 = scmp.ne.s32.totalorder %s138, %s139
      %p148 = scmp.eq.s32.totalorder %s23, 0
      %p149 = por %p147, %p148
      %p150 = scmp.ne.s32.totalorder %s138, %s139
      %p151 = scmp.eq.s32.totalorder %s24, 1
      %p152 = por %p150, %p151
      %p154 = scmp.ne.s32.totalorder %s139, %s153
      %p155 = scmp.eq.s32.totalorder %s24, 0
      %p156 = por %p154, %p155
      %s158 = sadd.s32 %s157, 1
      %p161 = scmp.eq.s32.totalorder %s18, 1
      %p162 = scmp.ne.s32.totalorder %s157, %s159
      %p163 = scmp.eq.s32.totalorder %s18, 0
      %p164 = por %p162, %p163
      %p165 = scmp.ne.s32.totalorder %s157, %s159
      %p166 = scmp.eq.s32.totalorder %s23, 1
      %p167 = por %p165, %p166
      %p168 = scmp.ne.s32.totalorder %s159, %s160
      %p169 = scmp.eq.s32.totalorder %s23, 0
      %p170 = por %p168, %p169
      %p171 = scmp.ne.s32.totalorder %s159, %s160
      %p172 = scmp.eq.s32.totalorder %s24, 1
      %p173 = por %p171, %p172
      %p175 = scmp.ne.s32.totalorder %s160, %s174
      %p176 = scmp.eq.s32.totalorder %s24, 0
      %p177 = por %p175, %p176
      %s179 = sadd.s32 %s178, 1
      %p182 = scmp.eq.s32.totalorder %s18, 1
      %p183 = scmp.ne.s32.totalorder %s178, %s180
      %p184 = scmp.eq.s32.totalorder %s18, 0
      %p185 = por %p183, %p184
      %p186 = scmp.ne.s32.totalorder %s178, %s180
      %p187 = scmp.eq.s32.totalorder %s23, 1
      %p188 = por %p186, %p187
      %p189 = scmp.ne.s32.totalorder %s180, %s181
      %p190 = scmp.eq.s32.totalorder %s23, 0
      %p191 = por %p189, %p190
      %p192 = scmp.ne.s32.totalorder %s180, %s181
      %p193 = scmp.eq.s32.totalorder %s24, 1
      %p194 = por %p192, %p193
      %p196 = scmp.ne.s32.totalorder %s181, %s195
      %p197 = scmp.eq.s32.totalorder %s24, 0
      %p198 = por %p196, %p197
      %s200 = sadd.s32 %s199, 1
      %p203 = scmp.eq.s32.totalorder %s18, 1
      %p204 = scmp.ne.s32.totalorder %s199, %s201
      %p205 = scmp.eq.s32.totalorder %s18, 0
      %p206 = por %p204, %p205
      %p207 = scmp.ne.s32.totalorder %s199, %s201
      %p208 = scmp.eq.s32.totalorder %s23, 1
      %p209 = por %p207, %p208
      %p210 = scmp.ne.s32.totalorder %s201, %s202
      %p211 = scmp.eq.s32.totalorder %s23, 0
      %p212 = por %p210, %p211
      %p213 = scmp.ne.s32.totalorder %s201, %s202
      %p214 = scmp.eq.s32.totalorder %s24, 1
      %p215 = por %p213, %p214
      %p217 = scmp.ne.s32.totalorder %s202, %s216
      %p218 = scmp.eq.s32.totalorder %s24, 0
      %p219 = por %p217, %p218
      %s220 = ssub.s32 %s18, %s25
      %p221 = scmp.eq.s32.totalorder %s220, 0
      %s223 = sadd.s32 %s222, 1
      %s224 = scalar_select %p221, %s222, %s223
      %p227 = pneg %p221
      %p228 = scmp.eq.s32.totalorder %s18, 1
      %p229 = por %p227, %p228
      %p230 = scmp.ne.s32.totalorder %s222, %s225
      %p231 = scmp.eq.s32.totalorder %s18, 0
      %p232 = por %p230, %p231
      %p233 = scmp.ne.s32.totalorder %s222, %s225
      %p234 = scmp.eq.s32.totalorder %s23, 1
      %p235 = por %p233, %p234
      %p236 = scmp.ne.s32.totalorder %s225, %s226
      %p237 = scmp.eq.s32.totalorder %s23, 0
      %p238 = por %p236, %p237
      %p239 = scmp.ne.s32.totalorder %s225, %s226
      %p240 = scmp.eq.s32.totalorder %s24, 1
      %p241 = por %p239, %p240
      %p243 = scmp.ne.s32.totalorder %s226, %s242
      %p244 = scmp.eq.s32.totalorder %s24, 0
      %p245 = por %p243, %p244
      %p246 = scmp.le.s32.totalorder 1, %s18
      %p247 = scmp.lt.s32.totalorder %s18, 3
      %p248 = pnand %p246, %p247
      %p249 = pneg %p248
      // Predicated region
      $region9: #{net_forward.1} parent=5 // pred_check
        _
      $region10: #{net_forward.1} parent=5 // pred_check_branch
        %251 = sbr.rel (%p248) target = $region12
      $region11: #{net_forward.1} parent=5 // pred_region
        %s252 = ssub.s32 %s18, 1
        // Predicated region
        $region13: #{net_forward.1} parent=11 // pred_check
          %p253 = pneg %p65
        $region14: #{net_forward.1} parent=11 // pred_check_branch
          %255 = sbr.rel (%p253) target = $region16
        $region15: #{net_forward.1} parent=11 // pred_region
          _
        $region16: #{net_forward.1} parent=11 // pred_fallthru
          _
        // Predicated region
        $region17: #{net_forward.1} parent=11 // pred_check
          %p256 = pneg %p86
        $region18: #{net_forward.1} parent=11 // pred_check_branch
          %258 = sbr.rel (%p256) target = $region20
        $region19: #{net_forward.1} parent=11 // pred_region
          _
        $region20: #{net_forward.1} parent=11 // pred_fallthru
          _
        // Predicated region
        $region21: #{net_forward.1} parent=11 // pred_check
          %p259 = pneg %p107
        $region22: #{net_forward.1} parent=11 // pred_check_branch
          %261 = sbr.rel (%p259) target = $region24
        $region23: #{net_forward.1} parent=11 // pred_region
          _
        $region24: #{net_forward.1} parent=11 // pred_fallthru
          _
        // Predicated region
        $region25: #{net_forward.1} parent=11 // pred_check
          %p262 = pneg %p128
        $region26: #{net_forward.1} parent=11 // pred_check_branch
          %264 = sbr.rel (%p262) target = $region28
        $region27: #{net_forward.1} parent=11 // pred_region
          _
        $region28: #{net_forward.1} parent=11 // pred_fallthru
          _
        // Predicated region
        $region29: #{net_forward.1} parent=11 // pred_check
          %p265 = pneg %p149
        $region30: #{net_forward.1} parent=11 // pred_check_branch
          %267 = sbr.rel (%p265) target = $region32
        $region31: #{net_forward.1} parent=11 // pred_region
          _
        $region32: #{net_forward.1} parent=11 // pred_fallthru
          _
        // Predicated region
        $region33: #{net_forward.1} parent=11 // pred_check
          %p268 = pneg %p170
        $region34: #{net_forward.1} parent=11 // pred_check_branch
          %270 = sbr.rel (%p268) target = $region36
        $region35: #{net_forward.1} parent=11 // pred_region
          _
        $region36: #{net_forward.1} parent=11 // pred_fallthru
          _
        // Predicated region
        $region37: #{net_forward.1} parent=11 // pred_check
          %p271 = pneg %p191
        $region38: #{net_forward.1} parent=11 // pred_check_branch
          %273 = sbr.rel (%p271) target = $region40
        $region39: #{net_forward.1} parent=11 // pred_region
          _
        $region40: #{net_forward.1} parent=11 // pred_fallthru
          _
        // Predicated region
        $region41: #{net_forward.1} parent=11 // pred_check
          %p274 = pneg %p212
        $region42: #{net_forward.1} parent=11 // pred_check_branch
          %276 = sbr.rel (%p274) target = $region44
        $region43: #{net_forward.1} parent=11 // pred_region
          _
        $region44: #{net_forward.1} parent=11 // pred_fallthru
          _
      $region12: #{net_forward.1} parent=5 // pred_fallthru
        _
      %p277 = scmp.lt.s32.totalorder %s18, 2
      // Predicated region
      $region45: #{net_forward.1} parent=5 // pred_check
        %p278 = pneg %p277
      $region46: #{net_forward.1} parent=5 // pred_check_branch
        %280 = sbr.rel (%p278) target = $region48
      $region47: #{net_forward.1} parent=5 // pred_region
        // Predicated region
        $region49: #{net_forward.1} parent=47 // pred_check
          %p281 = pneg %p38
        $region50: #{net_forward.1} parent=47 // pred_check_branch
          %283 = sbr.rel (%p281) target = $region52
        $region51: #{net_forward.1} parent=47 // pred_region
          %s284 = smul.u32 24, %s18
          %p285 = scmp.lt.s32.totalorder %s284, 47
          %s286 = scalar_select %p285, %s284, 47
          %s287 = smul.addr %s286, 2
          %s288 = smul.addr %s287, 8
          %s289 = scalar_lea.vmem %s0, %s288
          %s290 = smul.u32 24, %s18
        $region52: #{net_forward.1} parent=47 // pred_fallthru
          _
      $region48: #{net_forward.1} parent=5 // pred_fallthru
        _
      %p291 = scmp.le.s32.totalorder 1, %s18
      %p292 = scmp.lt.s32.totalorder %s18, 3
      %p293 = pnand %p291, %p292
      %p294 = pneg %p293
      // Predicated region
      $region53: #{net_forward.1} parent=5 // pred_check
        _
      $region54: #{net_forward.1} parent=5 // pred_check_branch
        %296 = sbr.rel (%p293) target = $region56
      $region55: #{net_forward.1} parent=5 // pred_region
        %s297 = ssub.s32 %s18, 1
        %s298 = smul.u32 24, %s23
        %p299 = scmp.lt.s32.totalorder %s298, 47
        %s300 = scalar_select %p299, %s298, 47
        %s301 = smul.addr %s300, 2
        %s302 = smul.addr %s301, 8
        %s303 = scalar_lea.vmem %s0, %s302
        %p304 = pneg %p44
        %p305 = pneg %p41
        %p306 = pneg %p65
        %p307 = pneg %p62
        %p308 = pneg %p86
        %p309 = pneg %p83
        %p310 = pneg %p107
        %p311 = pneg %p104
        %p312 = pneg %p128
        %p313 = pneg %p125
        %p314 = pneg %p149
        %p315 = pneg %p146
        %p316 = pneg %p170
        %p317 = pneg %p167
        %p318 = pneg %p191
        %p319 = pneg %p188
        %p320 = pneg %p212
        %p321 = pneg %p209
        %p322 = pneg %p238
        %p323 = pneg %p235
        %s324 = sand.u32 %s225, 1
        %s325 = scalar_lea.sflag [#allocation3], %s324
        %s326 = sand.u32 %s225, 1
        %s327 = smul.addr %s326, 8
        %s328 = scalar_lea.vmem [#allocation2], %s327
        %s329 = smul.u32 24, %s23
        %p330 = scmp.lt.s32.totalorder %s329, 47
        %s331 = scalar_select %p330, %s329, 47
        %s332 = smul.addr %s331, 2
        %s333 = smul.addr %s332, 8
        %s334 = scalar_lea.vmem %s0, %s333
        %s335 = smul.u32 24, %s23
        %v336 = vld [vmem:[%s334] sm:$0xff]
        %v337 = vld [vmem:[%s334 + $0x8] sm:$0xff]
        %v338 = vld [vmem:[%s334 + $0x10] sm:$0xff]
        %v339 = vld [vmem:[%s334 + $0x18] sm:$0xff]
        %v340 = vld [vmem:[%s334 + $0x20] sm:$0xff]
        %v341 = vld [vmem:[%s334 + $0x28] sm:$0xff]
        %v342 = vld [vmem:[%s334 + $0x30] sm:$0xff]
        %v343 = vld [vmem:[%s334 + $0x38] sm:$0xff]
        %v344 = vld [vmem:[%s334 + $0x40] sm:$0xff]
        %v345 = vld [vmem:[%s334 + $0x48] sm:$0xff]
        %v346 = vld [vmem:[%s334 + $0x50] sm:$0xff]
        %v347 = vld [vmem:[%s334 + $0x58] sm:$0xff]
        %v348 = vld [vmem:[%s334 + $0x60] sm:$0xff]
        %v349 = vld [vmem:[%s334 + $0x68] sm:$0xff]
        %v350 = vld [vmem:[%s334 + $0x70] sm:$0xff]
        %v351 = vld [vmem:[%s334 + $0x78] sm:$0xff]
        %v352 = vld [vmem:[%s334 + $0x80] sm:$0xff]
        %v353 = vld [vmem:[%s334 + $0x88] sm:$0xff]
        %v354 = vld [vmem:[%s334 + $0x90] sm:$0xff]
        %v355 = vld [vmem:[%s334 + $0x98] sm:$0xff]
        %v356 = vld [vmem:[%s334 + $0xa0] sm:$0xff]
        %v357 = vld [vmem:[%s334 + $0xa8] sm:$0xff]
        %v358 = vld [vmem:[%s334 + $0xb0] sm:$0xff]
        %v359 = vld [vmem:[%s334 + $0xb8] sm:$0xff]
        %v360 = vld [vmem:[%s334 + $0xc0] sm:$0xff]
        %v361 = vld [vmem:[%s334 + $0xc8] sm:$0xff]
        %v362 = vld [vmem:[%s334 + $0xd0] sm:$0xff]
        %v363 = vld [vmem:[%s334 + $0xd8] sm:$0xff]
        %v364 = vld [vmem:[%s334 + $0xe0] sm:$0xff]
        %v365 = vld [vmem:[%s334 + $0xe8] sm:$0xff]
        %v366 = vld [vmem:[%s334 + $0xf0] sm:$0xff]
        %v367 = vld [vmem:[%s334 + $0xf8] sm:$0xff]
        %v368 = vld [vmem:[%s334 + $0x100] sm:$0xff]
        %v369 = vld [vmem:[%s334 + $0x108] sm:$0xff]
        %v370 = vld [vmem:[%s334 + $0x110] sm:$0xff]
        %v371 = vld [vmem:[%s334 + $0x118] sm:$0xff]
        %v372 = vld [vmem:[%s334 + $0x120] sm:$0xff]
        %v373 = vld [vmem:[%s334 + $0x128] sm:$0xff]
        %v374 = vld [vmem:[%s334 + $0x130] sm:$0xff]
        %v375 = vld [vmem:[%s334 + $0x138] sm:$0xff]
        %v376 = vld [vmem:[%s334 + $0x140] sm:$0xff]
        %v377 = vld [vmem:[%s334 + $0x148] sm:$0xff]
        %v378 = vld [vmem:[%s334 + $0x150] sm:$0xff]
        %v379 = vld [vmem:[%s334 + $0x158] sm:$0xff]
        %v380 = vld [vmem:[%s334 + $0x160] sm:$0xff]
        %v381 = vld [vmem:[%s334 + $0x168] sm:$0xff]
        %v382 = vld [vmem:[%s334 + $0x170] sm:$0xff]
        %v383 = vld [vmem:[%s334 + $0x178] sm:$0xff]
        %v384 = vld [vmem:[%s1] sm:$0xff]
        %v385 = vld [vmem:[%s1 + $0x8] sm:$0xff]
        %v386 = vld [vmem:[%s1 + $0x10] sm:$0xff]
        %v387 = vld [vmem:[%s1 + $0x18] sm:$0xff]
        %v388 = vld [vmem:[%s1 + $0x20] sm:$0xff]
        %v389 = vld [vmem:[%s1 + $0x28] sm:$0xff]
        %v390 = vld [vmem:[%s1 + $0x30] sm:$0xff]
        %v391 = vld [vmem:[%s1 + $0x38] sm:$0xff]
        %v392 = vld [vmem:[%s1 + $0x40] sm:$0xff]
        %v393 = vld [vmem:[%s1 + $0x48] sm:$0xff]
        %v394 = vld [vmem:[%s1 + $0x50] sm:$0xff]
        %v395 = vld [vmem:[%s1 + $0x58] sm:$0xff]
        %v396 = vld [vmem:[%s1 + $0x60] sm:$0xff]
        %v397 = vld [vmem:[%s1 + $0x68] sm:$0xff]
        %v398 = vld [vmem:[%s1 + $0x70] sm:$0xff]
        %v399 = vld [vmem:[%s1 + $0x78] sm:$0xff]
        %v400 = vld [vmem:[%s1 + $0x80] sm:$0xff]
        %v401 = vld [vmem:[%s1 + $0x88] sm:$0xff]
        %v402 = vld [vmem:[%s1 + $0x90] sm:$0xff]
        %v403 = vld [vmem:[%s1 + $0x98] sm:$0xff]
        %v404 = vld [vmem:[%s1 + $0xa0] sm:$0xff]
        %v405 = vld [vmem:[%s1 + $0xa8] sm:$0xff]
        %v406 = vld [vmem:[%s1 + $0xb0] sm:$0xff]
        %v407 = vld [vmem:[%s1 + $0xb8] sm:$0xff]
        %v408 = vld [vmem:[%s1 + $0xc0] sm:$0xff]
        %v409 = vld [vmem:[%s1 + $0xc8] sm:$0xff]
        %v410 = vld [vmem:[%s1 + $0xd0] sm:$0xff]
        %v411 = vld [vmem:[%s1 + $0xd8] sm:$0xff]
        %v412 = vld [vmem:[%s1 + $0xe0] sm:$0xff]
        %v413 = vld [vmem:[%s1 + $0xe8] sm:$0xff]
        %v414 = vld [vmem:[%s1 + $0xf0] sm:$0xff]
        %v415 = vld [vmem:[%s1 + $0xf8] sm:$0xff]
        %v416 = vld [vmem:[%s1 + $0x100] sm:$0xff]
        %v417 = vld [vmem:[%s1 + $0x108] sm:$0xff]
        %v418 = vld [vmem:[%s1 + $0x110] sm:$0xff]
        %v419 = vld [vmem:[%s1 + $0x118] sm:$0xff]
        %v420 = vld [vmem:[%s1 + $0x120] sm:$0xff]
        %v421 = vld [vmem:[%s1 + $0x128] sm:$0xff]
        %v422 = vld [vmem:[%s1 + $0x130] sm:$0xff]
        %v423 = vld [vmem:[%s1 + $0x138] sm:$0xff]
        %v424 = vld [vmem:[%s2] sm:$0x3]
        %v426 = vlaneseq
        %v427 = vshrl.u32 %v426, 7
        %v428 = vsub.s32 0, %v427
        %v429 = vrot.slane %v424, %v428
        %v430 = vlaneseq
        %v431 = vshrl.u32 %v430, 7
        %v432 = vsub.s32 1, %v431
        %v433 = vrot.slane %v424, %v432
        %vm436 = vcmask 261120
        %v438 = vsel %vm436, %v337, 0
        %v441 = vsel %vm436, %v339, 0
        %v444 = vsel %vm436, %v341, 0
        %v447 = vsel %vm436, %v343, 0
        %v450 = vsel %vm436, %v345, 0
        %v453 = vsel %vm436, %v347, 0
        %v456 = vsel %vm436, %v349, 0
        %v459 = vsel %vm436, %v351, 0
        %v462 = vsel %vm436, %v353, 0
        %v465 = vsel %vm436, %v355, 0
        %v468 = vsel %vm436, %v357, 0
        %v471 = vsel %vm436, %v359, 0
        %v474 = vsel %vm436, %v361, 0
        %v477 = vsel %vm436, %v363, 0
        %v480 = vsel %vm436, %v365, 0
        %v483 = vsel %vm436, %v367, 0
        %v486 = vsel %vm436, %v369, 0
        %v489 = vsel %vm436, %v371, 0
        %v492 = vsel %vm436, %v373, 0
        %v495 = vsel %vm436, %v375, 0
        %v498 = vsel %vm436, %v377, 0
        %v501 = vsel %vm436, %v379, 0
        %v504 = vsel %vm436, %v381, 0
        %v507 = vsel %vm436, %v383, 0
        %509 = vmatprep.subr.mxu0 %v385
        %510 = vmatpush1.msra.mxu0 %v384
        %511 = vmatprep.subr.mxu0 %v387
        %512 = vmatpush1.msra.mxu0 %v386
        %513 = vmatprep.subr.mxu0 %v389
        %514 = vmatpush1.msra.mxu0 %v388
        %515 = vmatprep.subr.mxu0 %v391
        %516 = vmatpush1.msra.mxu0 %v390
        %517 = vmatprep.subr.mxu0 %v393
        %518 = vmatpush1.msra.mxu0 %v392
        %519 = vmatprep.subr.mxu0 %v395
        %520 = vmatpush1.msra.mxu0 %v394
        %521 = vmatprep.subr.mxu0 %v397
        %522 = vmatpush1.msra.mxu0 %v396
        %523 = vmatprep.subr.mxu0 %v399
        %524 = vmatpush1.msra.mxu0 %v398
        %525 = vmatprep.subr.mxu0 %v401
        %526 = vmatpush1.msra.mxu0 %v400
        %527 = vmatprep.subr.mxu0 %v403
        %528 = vmatpush1.msra.mxu0 %v402
        %529 = vmatprep.subr.mxu0 %v405
        %530 = vmatpush1.msra.mxu0 %v404
        %531 = vmatprep.subr.mxu0 %v407
        %532 = vmatpush1.msra.mxu0 %v406
        %533 = vmatprep.subr.mxu0 %v409
        %534 = vmatpush1.msra.mxu0 %v408
        %535 = vmatprep.subr.mxu0 %v411
        %536 = vmatpush1.msra.mxu0 %v410
        %537 = vmatprep.subr.mxu0 %v413
        %538 = vmatpush1.msra.mxu0 %v412
        %539 = vmatprep.subr.mxu0 %v415
        %540 = vmatpush1.msra.mxu0 %v414
        %541 = vmatprep.subr.mxu0 %v417
        %542 = vmatpush1.msra.mxu0 %v416
        %543 = vmatprep.subr.mxu0 %v419
        %544 = vmatpush1.msra.mxu0 %v418
        %545 = vmatprep.subr.mxu0 %v421
        %546 = vmatpush1.msra.mxu0 %v420
        %547 = vmatprep.subr.mxu0 %v423
        %548 = vmatpush1.msra.mxu0 %v422
        %549 = vmatprep.subr.mxu0 0.0
        %550 = vmatpush1.msra.mxu0 0.0
        %551 = vmatprep.subr.mxu0 0.0
        %552 = vmatpush1.msra.mxu0 0.0
        %553 = vmatprep.subr.mxu0 0.0
        %554 = vmatpush1.msra.mxu0 0.0
        %555 = vmatprep.subr.mxu0 0.0
        %556 = vmatpush1.msra.mxu0 0.0
        %557 = vmatprep.subr.mxu0 0.0
        %558 = vmatpush1.msra.mxu0 0.0
        %559 = vmatprep.subr.mxu0 0.0
        %560 = vmatpush1.msra.mxu0 0.0
        %561 = vmatprep.subr.mxu0 0.0
        %562 = vmatpush1.msra.mxu0 0.0
        %563 = vmatprep.subr.mxu0 0.0
        %564 = vmatpush1.msra.mxu0 0.0
        %565 = vmatprep.subr.mxu0 0.0
        %566 = vmatpush1.msra.mxu0 0.0
        %567 = vmatprep.subr.mxu0 0.0
        %568 = vmatpush1.msra.mxu0 0.0
        %569 = vmatprep.subr.mxu0 0.0
        %570 = vmatpush1.msra.mxu0 0.0
        %571 = vmatprep.subr.mxu0 0.0
        %572 = vmatpush1.msra.mxu0 0.0
        %573 = vmatprep.mubr.f32.mxu0 %v438
        %574 = vmatmul.mubr.f32.gmra.mrb[0].mxu0 %v336
        %v575 = vpop.f32.mrb[0].mxu0
        %v576 = vadd.f32 %v429, %v575
        %v577 = vpop.f32.mrb[0].mxu0
        %v578 = vadd.f32 %v433, %v577
        %579 = vmatprep.mubr.f32.mxu0 %v441
        %580 = vmatmul.mubr.f32.gmra.mrb[0].mxu0 %v338
        %v581 = vpop.f32.mrb[0].mxu0
        %v582 = vadd.f32 %v429, %v581
        %v583 = vpop.f32.mrb[0].mxu0
        %v584 = vadd.f32 %v433, %v583
        %585 = vmatprep.mubr.f32.mxu0 %v444
        %586 = vmatmul.mubr.f32.gmra.mrb[0].mxu0 %v340
        %v587 = vpop.f32.mrb[0].mxu0
        %v588 = vadd.f32 %v429, %v587
        %v589 = vpop.f32.mrb[0].mxu0
        %v590 = vadd.f32 %v433, %v589
        %591 = vmatprep.mubr.f32.mxu0 %v447
        %592 = vmatmul.mubr.f32.gmra.mrb[0].mxu0 %v342
        %v593 = vpop.f32.mrb[0].mxu0
        %v594 = vadd.f32 %v429, %v593
        %v595 = vpop.f32.mrb[0].mxu0
        %v596 = vadd.f32 %v433, %v595
        %597 = vmatprep.mubr.f32.mxu0 %v450
        %598 = vmatmul.mubr.f32.gmra.mrb[0].mxu0 %v344
        %v599 = vpop.f32.mrb[0].mxu0
        %v600 = vadd.f32 %v429, %v599
        %v601 = vpop.f32.mrb[0].mxu0
        %v602 = vadd.f32 %v433, %v601
        %603 = vmatprep.mubr.f32.mxu0 %v453
        %604 = vmatmul.mubr.f32.gmra.mrb[0].mxu0 %v346
        %v605 = vpop.f32.mrb[0].mxu0
        %v606 = vadd.f32 %v429, %v605
        %v607 = vpop.f32.mrb[0].mxu0
        %v608 = vadd.f32 %v433, %v607
        %609 = vmatprep.mubr.f32.mxu0 %v456
        %610 = vmatmul.mubr.f32.gmra.mrb[0].mxu0 %v348
        %v611 = vpop.f32.mrb[0].mxu0
        %v612 = vadd.f32 %v429, %v611
        %v613 = vpop.f32.mrb[0].mxu0
        %v614 = vadd.f32 %v433, %v613
        %615 = vmatprep.mubr.f32.mxu0 %v459
        %616 = vmatmul.mubr.f32.gmra.mrb[0].mxu0 %v350
        %v617 = vpop.f32.mrb[0].mxu0
        %v618 = vadd.f32 %v429, %v617
        %v619 = vpop.f32.mrb[0].mxu0
        %v620 = vadd.f32 %v433, %v619
        %621 = vmatprep.mubr.f32.mxu0 %v462
        %622 = vmatmul.mubr.f32.gmra.mrb[0].mxu0 %v352
        %v623 = vpop.f32.mrb[0].mxu0
        %v624 = vadd.f32 %v429, %v623
        %v625 = vpop.f32.mrb[0].mxu0
        %v626 = vadd.f32 %v433, %v625
        %627 = vmatprep.mubr.f32.mxu0 %v465
        %628 = vmatmul.mubr.f32.gmra.mrb[0].mxu0 %v354
        %v629 = vpop.f32.mrb[0].mxu0
        %v630 = vadd.f32 %v429, %v629
        %v631 = vpop.f32.mrb[0].mxu0
        %v632 = vadd.f32 %v433, %v631
        %633 = vmatprep.mubr.f32.mxu0 %v468
        %634 = vmatmul.mubr.f32.gmra.mrb[0].mxu0 %v356
        %v635 = vpop.f32.mrb[0].mxu0
        %v636 = vadd.f32 %v429, %v635
        %v637 = vpop.f32.mrb[0].mxu0
        %v638 = vadd.f32 %v433, %v637
        %639 = vmatprep.mubr.f32.mxu0 %v471
        %640 = vmatmul.mubr.f32.gmra.mrb[0].mxu0 %v358
        %v641 = vpop.f32.mrb[0].mxu0
        %v642 = vadd.f32 %v429, %v641
        %v643 = vpop.f32.mrb[0].mxu0
        %v644 = vadd.f32 %v433, %v643
        %645 = vmatprep.mubr.f32.mxu0 %v474
        %646 = vmatmul.mubr.f32.gmra.mrb[0].mxu0 %v360
        %v647 = vpop.f32.mrb[0].mxu0
        %v648 = vadd.f32 %v429, %v647
        %v649 = vpop.f32.mrb[0].mxu0
        %v650 = vadd.f32 %v433, %v649
        %651 = vmatprep.mubr.f32.mxu0 %v477
        %652 = vmatmul.mubr.f32.gmra.mrb[0].mxu0 %v362
        %v653 = vpop.f32.mrb[0].mxu0
        %v654 = vadd.f32 %v429, %v653
        %v655 = vpop.f32.mrb[0].mxu0
        %v656 = vadd.f32 %v433, %v655
        %657 = vmatprep.mubr.f32.mxu0 %v480
        %658 = vmatmul.mubr.f32.gmra.mrb[0].mxu0 %v364
        %v659 = vpop.f32.mrb[0].mxu0
        %v660 = vadd.f32 %v429, %v659
        %v661 = vpop.f32.mrb[0].mxu0
        %v662 = vadd.f32 %v433, %v661
        %663 = vmatprep.mubr.f32.mxu0 %v483
        %664 = vmatmul.mubr.f32.gmra.mrb[0].mxu0 %v366
        %v665 = vpop.f32.mrb[0].mxu0
        %v666 = vadd.f32 %v429, %v665
        %v667 = vpop.f32.mrb[0].mxu0
        %v668 = vadd.f32 %v433, %v667
        %669 = vmatprep.mubr.f32.mxu0 %v486
        %670 = vmatmul.mubr.f32.gmra.mrb[0].mxu0 %v368
        %v671 = vpop.f32.mrb[0].mxu0
        %v672 = vadd.f32 %v429, %v671
        %v673 = vpop.f32.mrb[0].mxu0
        %v674 = vadd.f32 %v433, %v673
        %675 = vmatprep.mubr.f32.mxu0 %v489
        %676 = vmatmul.mubr.f32.gmra.mrb[0].mxu0 %v370
        %v677 = vpop.f32.mrb[0].mxu0
        %v678 = vadd.f32 %v429, %v677
        %v679 = vpop.f32.mrb[0].mxu0
        %v680 = vadd.f32 %v433, %v679
        %681 = vmatprep.mubr.f32.mxu0 %v492
        %682 = vmatmul.mubr.f32.gmra.mrb[0].mxu0 %v372
        %v683 = vpop.f32.mrb[0].mxu0
        %v684 = vadd.f32 %v429, %v683
        %v685 = vpop.f32.mrb[0].mxu0
        %v686 = vadd.f32 %v433, %v685
        %687 = vmatprep.mubr.f32.mxu0 %v495
        %688 = vmatmul.mubr.f32.gmra.mrb[0].mxu0 %v374
        %v689 = vpop.f32.mrb[0].mxu0
        %v690 = vadd.f32 %v429, %v689
        %v691 = vpop.f32.mrb[0].mxu0
        %v692 = vadd.f32 %v433, %v691
        %693 = vmatprep.mubr.f32.mxu0 %v498
        %694 = vmatmul.mubr.f32.gmra.mrb[0].mxu0 %v376
        %v695 = vpop.f32.mrb[0].mxu0
        %v696 = vadd.f32 %v429, %v695
        %v697 = vpop.f32.mrb[0].mxu0
        %v698 = vadd.f32 %v433, %v697
        %699 = vmatprep.mubr.f32.mxu0 %v501
        %700 = vmatmul.mubr.f32.gmra.mrb[0].mxu0 %v378
        %v701 = vpop.f32.mrb[0].mxu0
        %v702 = vadd.f32 %v429, %v701
        %v703 = vpop.f32.mrb[0].mxu0
        %v704 = vadd.f32 %v433, %v703
        %705 = vmatprep.mubr.f32.mxu0 %v504
        %706 = vmatmul.mubr.f32.gmra.mrb[0].mxu0 %v380
        %v707 = vpop.f32.mrb[0].mxu0
        %v708 = vadd.f32 %v429, %v707
        %v709 = vpop.f32.mrb[0].mxu0
        %v710 = vadd.f32 %v433, %v709
        %711 = vmatprep.mubr.f32.mxu0 %v507
        %712 = vmatmul.mubr.f32.gmra.mrb[0].mxu0 %v382
        %v713 = vpop.f32.mrb[0].mxu0
        %v714 = vadd.f32 %v429, %v713
        %v715 = vpop.f32.mrb[0].mxu0
        %v716 = vadd.f32 %v433, %v715
        %717 = vdwg.mxu0
        %v718 = vmax.f32 %v576, %v578
        %v719 = vmax.f32 %v582, %v584
        %v720 = vmax.f32 %v588, %v590
        %v721 = vmax.f32 %v594, %v596
        %v722 = vmax.f32 %v600, %v602
        %v723 = vmax.f32 %v606, %v608
        %v724 = vmax.f32 %v612, %v614
        %v725 = vmax.f32 %v618, %v620
        %v726 = vmax.f32 %v624, %v626
        %v727 = vmax.f32 %v630, %v632
        %v728 = vmax.f32 %v636, %v638
        %v729 = vmax.f32 %v642, %v644
        %v730 = vmax.f32 %v648, %v650
        %v731 = vmax.f32 %v654, %v656
        %v732 = vmax.f32 %v660, %v662
        %v733 = vmax.f32 %v666, %v668
        %v734 = vmax.f32 %v672, %v674
        %v735 = vmax.f32 %v678, %v680
        %v736 = vmax.f32 %v684, %v686
        %v737 = vmax.f32 %v690, %v692
        %v738 = vmax.f32 %v696, %v698
        %v739 = vmax.f32 %v702, %v704
        %v740 = vmax.f32 %v708, %v710
        %v741 = vmax.f32 %v714, %v716
        %v742 = vmax.f32 %v718, %v730
        %v743 = vmax.f32 %v719, %v731
        %v744 = vmax.f32 %v720, %v732
        %v745 = vmax.f32 %v721, %v733
        %v746 = vmax.f32 %v722, %v734
        %v747 = vmax.f32 %v723, %v735
        %v748 = vmax.f32 %v724, %v736
        %v749 = vmax.f32 %v725, %v737
        %v750 = vmax.f32 %v726, %v738
        %v751 = vmax.f32 %v727, %v739
        %v752 = vmax.f32 %v728, %v740
        %v753 = vmax.f32 %v729, %v741
        %v754 = vmax.f32 %v742, 0.0
        %v755 = vmax.f32 %v743, 0.0
        %v756 = vmax.f32 %v744, 0.0
        %v757 = vmax.f32 %v745, 0.0
        %v758 = vmax.f32 %v746, 0.0
        %v759 = vmax.f32 %v747, 0.0
        %v760 = vmax.f32 %v748, 0.0
        %v761 = vmax.f32 %v749, 0.0
        %v762 = vmax.f32 %v750, 0.0
        %v763 = vmax.f32 %v751, 0.0
        %v764 = vmax.f32 %v752, 0.0
        %v765 = vmax.f32 %v753, 0.0
        %v766 = vld [vmem:[%s3] sm:$0xff]
        %v767 = vld [vmem:[%s3 + $0x8] sm:$0xff]
        %v768 = vld [vmem:[%s3 + $0x10] sm:$0xff]
        %v769 = vld [vmem:[%s3 + $0x18] sm:$0xff]
        %v770 = vld [vmem:[%s3 + $0x20] sm:$0xff]
        %v771 = vld [vmem:[%s3 + $0x28] sm:$0xff]
        %v772 = vld [vmem:[%s3 + $0x30] sm:$0xff]
        %v773 = vld [vmem:[%s3 + $0x38] sm:$0xff]
        %v774 = vld [vmem:[%s3 + $0x40] sm:$0xff]
        %v775 = vld [vmem:[%s3 + $0x48] sm:$0xff]
        %v776 = vld [vmem:[%s3 + $0x50] sm:$0xff]
        %v777 = vld [vmem:[%s3 + $0x58] sm:$0xff]
        %v778 = vld [vmem:[%s3 + $0x60] sm:$0xff]
        %v779 = vld [vmem:[%s3 + $0x68] sm:$0xff]
        %v780 = vld [vmem:[%s3 + $0x70] sm:$0xff]
        %v781 = vld [vmem:[%s3 + $0x78] sm:$0xff]
        %v782 = vld [vmem:[%s3 + $0x80] sm:$0xff]
        %v783 = vld [vmem:[%s3 + $0x88] sm:$0xff]
        %v784 = vld [vmem:[%s3 + $0x90] sm:$0xff]
        %v785 = vld [vmem:[%s3 + $0x98] sm:$0xff]
        %v786 = vld [vmem:[%s3 + $0xa0] sm:$0xff]
        %v787 = vld [vmem:[%s3 + $0xa8] sm:$0xff]
        %v788 = vld [vmem:[%s3 + $0xb0] sm:$0xff]
        %v789 = vld [vmem:[%s3 + $0xb8] sm:$0xff]
        %v790 = vld [vmem:[%s3 + $0xc0] sm:$0xff]
        %v791 = vld [vmem:[%s3 + $0xc8] sm:$0xff]
        %v792 = vld [vmem:[%s3 + $0xd0] sm:$0xff]
        %v793 = vld [vmem:[%s3 + $0xd8] sm:$0xff]
        %v794 = vld [vmem:[%s3 + $0xe0] sm:$0xff]
        %v795 = vld [vmem:[%s3 + $0xe8] sm:$0xff]
        %v796 = vld [vmem:[%s3 + $0xf0] sm:$0xff]
        %v797 = vld [vmem:[%s3 + $0xf8] sm:$0xff]
        %v798 = vld [vmem:[%s3 + $0x100] sm:$0xff]
        %v799 = vld [vmem:[%s3 + $0x108] sm:$0xff]
        %v800 = vld [vmem:[%s3 + $0x110] sm:$0xff]
        %v801 = vld [vmem:[%s3 + $0x118] sm:$0xff]
        %v802 = vld [vmem:[%s3 + $0x120] sm:$0xff]
        %v803 = vld [vmem:[%s3 + $0x128] sm:$0xff]
        %v804 = vld [vmem:[%s3 + $0x130] sm:$0xff]
        %v805 = vld [vmem:[%s3 + $0x138] sm:$0xff]
        %v806 = vld [vmem:[%s3 + $0x140] sm:$0xff]
        %v807 = vld [vmem:[%s3 + $0x148] sm:$0xff]
        %v808 = vld [vmem:[%s3 + $0x150] sm:$0xff]
        %v809 = vld [vmem:[%s3 + $0x158] sm:$0xff]
        %v810 = vld [vmem:[%s3 + $0x160] sm:$0xff]
        %v811 = vld [vmem:[%s3 + $0x168] sm:$0xff]
        %v812 = vld [vmem:[%s3 + $0x170] sm:$0xff]
        %v813 = vld [vmem:[%s3 + $0x178] sm:$0xff]
        %v814 = vld [vmem:[%s3 + $0x180] sm:$0xff]
        %v815 = vld [vmem:[%s3 + $0x188] sm:$0xff]
        %v816 = vld [vmem:[%s3 + $0x190] sm:$0xff]
        %v817 = vld [vmem:[%s3 + $0x198] sm:$0xff]
        %v818 = vld [vmem:[%s3 + $0x1a0] sm:$0xff]
        %v819 = vld [vmem:[%s3 + $0x1a8] sm:$0xff]
        %v820 = vld [vmem:[%s3 + $0x1b0] sm:$0xff]
        %v821 = vld [vmem:[%s3 + $0x1b8] sm:$0xff]
        %v822 = vld [vmem:[%s3 + $0x1c0] sm:$0xff]
        %v823 = vld [vmem:[%s3 + $0x1c8] sm:$0xff]
        %v824 = vld [vmem:[%s3 + $0x1d0] sm:$0xff]
        %v825 = vld [vmem:[%s3 + $0x1d8] sm:$0xff]
        %v826 = vld [vmem:[%s3 + $0x1e0] sm:$0xff]
        %v827 = vld [vmem:[%s3 + $0x1e8] sm:$0xff]
        %v828 = vld [vmem:[%s3 + $0x1f0] sm:$0xff]
        %v829 = vld [vmem:[%s3 + $0x1f8] sm:$0xff]
        %v830 = vld [vmem:[%s3 + $0x200] sm:$0xff]
        %v831 = vld [vmem:[%s3 + $0x208] sm:$0xff]
        %v832 = vld [vmem:[%s3 + $0x210] sm:$0xff]
        %v833 = vld [vmem:[%s3 + $0x218] sm:$0xff]
        %v834 = vld [vmem:[%s3 + $0x220] sm:$0xff]
        %v835 = vld [vmem:[%s3 + $0x228] sm:$0xff]
        %v836 = vld [vmem:[%s3 + $0x230] sm:$0xff]
        %v837 = vld [vmem:[%s3 + $0x238] sm:$0xff]
        %v838 = vld [vmem:[%s3 + $0x240] sm:$0xff]
        %v839 = vld [vmem:[%s3 + $0x248] sm:$0xff]
        %v840 = vld [vmem:[%s3 + $0x250] sm:$0xff]
        %v841 = vld [vmem:[%s3 + $0x258] sm:$0xff]
        %v842 = vld [vmem:[%s3 + $0x260] sm:$0xff]
        %v843 = vld [vmem:[%s3 + $0x268] sm:$0xff]
        %v844 = vld [vmem:[%s3 + $0x270] sm:$0xff]
        %v845 = vld [vmem:[%s3 + $0x278] sm:$0xff]
        %v846 = vld [vmem:[%s3 + $0x280] sm:$0xff]
        %v847 = vld [vmem:[%s3 + $0x288] sm:$0xff]
        %v848 = vld [vmem:[%s3 + $0x290] sm:$0xff]
        %v849 = vld [vmem:[%s3 + $0x298] sm:$0xff]
        %v850 = vld [vmem:[%s3 + $0x2a0] sm:$0xff]
        %v851 = vld [vmem:[%s3 + $0x2a8] sm:$0xff]
        %v852 = vld [vmem:[%s3 + $0x2b0] sm:$0xff]
        %v853 = vld [vmem:[%s3 + $0x2b8] sm:$0xff]
        %v854 = vld [vmem:[%s3 + $0x2c0] sm:$0xff]
        %v855 = vld [vmem:[%s3 + $0x2c8] sm:$0xff]
        %v856 = vld [vmem:[%s3 + $0x2d0] sm:$0xff]
        %v857 = vld [vmem:[%s3 + $0x2d8] sm:$0xff]
        %v858 = vld [vmem:[%s3 + $0x2e0] sm:$0xff]
        %v859 = vld [vmem:[%s3 + $0x2e8] sm:$0xff]
        %v860 = vld [vmem:[%s3 + $0x2f0] sm:$0xff]
        %v861 = vld [vmem:[%s3 + $0x2f8] sm:$0xff]
        %v862 = vld [vmem:[%s3 + $0x300] sm:$0xff]
        %v863 = vld [vmem:[%s3 + $0x308] sm:$0xff]
        %v864 = vld [vmem:[%s3 + $0x310] sm:$0xff]
        %v865 = vld [vmem:[%s3 + $0x318] sm:$0xff]
        %v866 = vld [vmem:[%s3 + $0x320] sm:$0xff]
        %v867 = vld [vmem:[%s3 + $0x328] sm:$0xff]
        %v868 = vld [vmem:[%s3 + $0x330] sm:$0xff]
        %v869 = vld [vmem:[%s3 + $0x338] sm:$0xff]
        %v870 = vld [vmem:[%s3 + $0x340] sm:$0xff]
        %v871 = vld [vmem:[%s3 + $0x348] sm:$0xff]
        %v872 = vld [vmem:[%s3 + $0x350] sm:$0xff]
        %v873 = vld [vmem:[%s3 + $0x358] sm:$0xff]
        %v874 = vld [vmem:[%s3 + $0x360] sm:$0xff]
        %v875 = vld [vmem:[%s3 + $0x368] sm:$0xff]
        %v876 = vld [vmem:[%s3 + $0x370] sm:$0xff]
        %v877 = vld [vmem:[%s3 + $0x378] sm:$0xff]
        %v878 = vld [vmem:[%s3 + $0x380] sm:$0xff]
        %v879 = vld [vmem:[%s3 + $0x388] sm:$0xff]
        %v880 = vld [vmem:[%s3 + $0x390] sm:$0xff]
        %v881 = vld [vmem:[%s3 + $0x398] sm:$0xff]
        %v882 = vld [vmem:[%s3 + $0x3a0] sm:$0xff]
        %v883 = vld [vmem:[%s3 + $0x3a8] sm:$0xff]
        %v884 = vld [vmem:[%s3 + $0x3b0] sm:$0xff]
        %v885 = vld [vmem:[%s3 + $0x3b8] sm:$0xff]
        %v886 = vld [vmem:[%s3 + $0x3c0] sm:$0xff]
        %v887 = vld [vmem:[%s3 + $0x3c8] sm:$0xff]
        %v888 = vld [vmem:[%s3 + $0x3d0] sm:$0xff]
        %v889 = vld [vmem:[%s3 + $0x3d8] sm:$0xff]
        %v890 = vld [vmem:[%s3 + $0x3e0] sm:$0xff]
        %v891 = vld [vmem:[%s3 + $0x3e8] sm:$0xff]
        %v892 = vld [vmem:[%s3 + $0x3f0] sm:$0xff]
        %v893 = vld [vmem:[%s3 + $0x3f8] sm:$0xff]
        %v894 = vld [vmem:[%s3 + $0x400] sm:$0xff]
        %v895 = vld [vmem:[%s3 + $0x408] sm:$0xff]
        %v896 = vld [vmem:[%s3 + $0x410] sm:$0xff]
        %v897 = vld [vmem:[%s3 + $0x418] sm:$0xff]
        %v898 = vld [vmem:[%s3 + $0x420] sm:$0xff]
        %v899 = vld [vmem:[%s3 + $0x428] sm:$0xff]
        %v900 = vld [vmem:[%s3 + $0x430] sm:$0xff]
        %v901 = vld [vmem:[%s3 + $0x438] sm:$0xff]
        %v902 = vld [vmem:[%s3 + $0x440] sm:$0xff]
        %v903 = vld [vmem:[%s3 + $0x448] sm:$0xff]
        %v904 = vld [vmem:[%s3 + $0x450] sm:$0xff]
        %v905 = vld [vmem:[%s3 + $0x458] sm:$0xff]
        %v906 = vld [vmem:[%s3 + $0x460] sm:$0xff]
        %v907 = vld [vmem:[%s3 + $0x468] sm:$0xff]
        %v908 = vld [vmem:[%s3 + $0x470] sm:$0xff]
        %v909 = vld [vmem:[%s3 + $0x478] sm:$0xff]
        %v910 = vld [vmem:[%s3 + $0x480] sm:$0xff]
        %v911 = vld [vmem:[%s3 + $0x488] sm:$0xff]
        %v912 = vld [vmem:[%s3 + $0x490] sm:$0xff]
        %v913 = vld [vmem:[%s3 + $0x498] sm:$0xff]
        %v914 = vld [vmem:[%s3 + $0x4a0] sm:$0xff]
        %v915 = vld [vmem:[%s3 + $0x4a8] sm:$0xff]
        %v916 = vld [vmem:[%s3 + $0x4b0] sm:$0xff]
        %v917 = vld [vmem:[%s3 + $0x4b8] sm:$0xff]
        %v918 = vld [vmem:[%s3 + $0x4c0] sm:$0xff]
        %v919 = vld [vmem:[%s3 + $0x4c8] sm:$0xff]
        %v920 = vld [vmem:[%s3 + $0x4d0] sm:$0xff]
        %v921 = vld [vmem:[%s3 + $0x4d8] sm:$0xff]
        %v922 = vld [vmem:[%s3 + $0x4e0] sm:$0xff]
        %v923 = vld [vmem:[%s3 + $0x4e8] sm:$0xff]
        %v924 = vld [vmem:[%s3 + $0x4f0] sm:$0xff]
        %v925 = vld [vmem:[%s3 + $0x4f8] sm:$0xff]
        %v926 = vld [vmem:[%s4] sm:$0x3]
        %v928 = vlaneseq
        %v929 = vshrl.u32 %v928, 7
        %v930 = vsub.s32 0, %v929
        %v931 = vrot.slane %v926, %v930
        %v932 = vlaneseq
        %v933 = vshrl.u32 %v932, 7
        %v934 = vsub.s32 1, %v933
        %v935 = vrot.slane %v926, %v934
        %938 = vmatprep.subr.mxu0 %v767
        %939 = vmatpush1.msra.mxu0 %v766
        %940 = vmatprep.subr.mxu0 %v769
        %941 = vmatpush1.msra.mxu0 %v768
        %942 = vmatprep.subr.mxu0 %v771
        %943 = vmatpush1.msra.mxu0 %v770
        %944 = vmatprep.subr.mxu0 %v773
        %945 = vmatpush1.msra.mxu0 %v772
        %946 = vmatprep.subr.mxu0 %v775
        %947 = vmatpush1.msra.mxu0 %v774
        %948 = vmatprep.subr.mxu0 %v777
        %949 = vmatpush1.msra.mxu0 %v776
        %950 = vmatprep.subr.mxu0 %v779
        %951 = vmatpush1.msra.mxu0 %v778
        %952 = vmatprep.subr.mxu0 %v781
        %953 = vmatpush1.msra.mxu0 %v780
        %954 = vmatprep.subr.mxu0 %v783
        %955 = vmatpush1.msra.mxu0 %v782
        %956 = vmatprep.subr.mxu0 %v785
        %957 = vmatpush1.msra.mxu0 %v784
        %958 = vmatprep.subr.mxu0 %v787
        %959 = vmatpush1.msra.mxu0 %v786
        %960 = vmatprep.subr.mxu0 %v789
        %961 = vmatpush1.msra.mxu0 %v788
        %962 = vmatprep.subr.mxu0 %v791
        %963 = vmatpush1.msra.mxu0 %v790
        %964 = vmatprep.subr.mxu0 %v793
        %965 = vmatpush1.msra.mxu0 %v792
        %966 = vmatprep.subr.mxu0 %v795
        %967 = vmatpush1.msra.mxu0 %v794
        %968 = vmatprep.subr.mxu0 %v797
        %969 = vmatpush1.msra.mxu0 %v796
        %970 = vmatprep.subr.mxu0 %v799
        %971 = vmatpush1.msra.mxu0 %v798
        %972 = vmatprep.subr.mxu0 %v801
        %973 = vmatpush1.msra.mxu0 %v800
        %974 = vmatprep.subr.mxu0 %v803
        %975 = vmatpush1.msra.mxu0 %v802
        %976 = vmatprep.subr.mxu0 %v805
        %977 = vmatpush1.msra.mxu0 %v804
        %978 = vmatprep.subr.mxu0 %v807
        %979 = vmatpush1.msra.mxu0 %v806
        %980 = vmatprep.subr.mxu0 %v809
        %981 = vmatpush1.msra.mxu0 %v808
        %982 = vmatprep.subr.mxu0 %v811
        %983 = vmatpush1.msra.mxu0 %v810
        %984 = vmatprep.subr.mxu0 %v813
        %985 = vmatpush1.msra.mxu0 %v812
        %986 = vmatprep.subr.mxu0 %v815
        %987 = vmatpush1.msra.mxu0 %v814
        %988 = vmatprep.subr.mxu0 %v817
        %989 = vmatpush1.msra.mxu0 %v816
        %990 = vmatprep.subr.mxu0 %v819
        %991 = vmatpush1.msra.mxu0 %v818
        %992 = vmatprep.subr.mxu0 %v821
        %993 = vmatpush1.msra.mxu0 %v820
        %994 = vmatprep.subr.mxu0 %v823
        %995 = vmatpush1.msra.mxu0 %v822
        %996 = vmatprep.subr.mxu0 %v825
        %997 = vmatpush1.msra.mxu0 %v824
        %998 = vmatprep.subr.mxu0 %v827
        %999 = vmatpush1.msra.mxu0 %v826
        %1000 = vmatprep.subr.mxu0 %v829
        %1001 = vmatpush1.msra.mxu0 %v828
        %1002 = vmatprep.mubr.f32.mxu0 %v755
        %1003 = vmatmul.mubr.f32.gmra.mrb[0].mxu0 %v754
        %v1004 = vpop.f32.mrb[0].mxu0
        %v1005 = vadd.f32 %v931, %v1004
        %v1006 = vpop.f32.mrb[0].mxu0
        %v1007 = vadd.f32 %v935, %v1006
        %1008 = vmatprep.mubr.f32.mxu0 %v756
        %1009 = vmatmul.mubr.f32.gmra.mrb[0].mxu0 %v755
        %v1010 = vpop.f32.mrb[0].mxu0
        %v1011 = vadd.f32 %v931, %v1010
        %v1012 = vpop.f32.mrb[0].mxu0
        %v1013 = vadd.f32 %v935, %v1012
        %1014 = vmatprep.mubr.f32.mxu0 %v757
        %1015 = vmatmul.mubr.f32.gmra.mrb[0].mxu0 %v756
        %v1016 = vpop.f32.mrb[0].mxu0
        %v1017 = vadd.f32 %v931, %v1016
        %v1018 = vpop.f32.mrb[0].mxu0
        %v1019 = vadd.f32 %v935, %v1018
        %1020 = vmatprep.mubr.f32.mxu0 %v758
        %1021 = vmatmul.mubr.f32.gmra.mrb[0].mxu0 %v757
        %v1022 = vpop.f32.mrb[0].mxu0
        %v1023 = vadd.f32 %v931, %v1022
        %v1024 = vpop.f32.mrb[0].mxu0
        %v1025 = vadd.f32 %v935, %v1024
        %1026 = vmatprep.mubr.f32.mxu0 %v759
        %1027 = vmatmul.mubr.f32.gmra.mrb[0].mxu0 %v758
        %v1028 = vpop.f32.mrb[0].mxu0
        %v1029 = vadd.f32 %v931, %v1028
        %v1030 = vpop.f32.mrb[0].mxu0
        %v1031 = vadd.f32 %v935, %v1030
        %1032 = vmatprep.mubr.f32.mxu0 %v760
        %1033 = vmatmul.mubr.f32.gmra.mrb[0].mxu0 %v759
        %v1034 = vpop.f32.mrb[0].mxu0
        %v1035 = vadd.f32 %v931, %v1034
        %v1036 = vpop.f32.mrb[0].mxu0
        %v1037 = vadd.f32 %v935, %v1036
        %1038 = vmatprep.mubr.f32.mxu0 %v761
        %1039 = vmatmul.mubr.f32.gmra.mrb[0].mxu0 %v760
        %v1040 = vpop.f32.mrb[0].mxu0
        %v1041 = vadd.f32 %v931, %v1040
        %v1042 = vpop.f32.mrb[0].mxu0
        %v1043 = vadd.f32 %v935, %v1042
        %1044 = vmatprep.mubr.f32.mxu0 %v762
        %1045 = vmatmul.mubr.f32.gmra.mrb[0].mxu0 %v761
        %v1046 = vpop.f32.mrb[0].mxu0
        %v1047 = vadd.f32 %v931, %v1046
        %v1048 = vpop.f32.mrb[0].mxu0
        %v1049 = vadd.f32 %v935, %v1048
        %1050 = vdwg.mxu0
        %1051 = vmatprep.subr.mxu0 %v831
        %1052 = vmatpush1.msra.mxu0 %v830
        %1053 = vmatprep.subr.mxu0 %v833
        %1054 = vmatpush1.msra.mxu0 %v832
        %1055 = vmatprep.subr.mxu0 %v835
        %1056 = vmatpush1.msra.mxu0 %v834
        %1057 = vmatprep.subr.mxu0 %v837
        %1058 = vmatpush1.msra.mxu0 %v836
        %1059 = vmatprep.subr.mxu0 %v839
        %1060 = vmatpush1.msra.mxu0 %v838
        %1061 = vmatprep.subr.mxu0 %v841
        %1062 = vmatpush1.msra.mxu0 %v840
        %1063 = vmatprep.subr.mxu0 %v843
        %1064 = vmatpush1.msra.mxu0 %v842
        %1065 = vmatprep.subr.mxu0 %v845
        %1066 = vmatpush1.msra.mxu0 %v844
        %1067 = vmatprep.subr.mxu0 %v847
        %1068 = vmatpush1.msra.mxu0 %v846
        %1069 = vmatprep.subr.mxu0 %v849
        %1070 = vmatpush1.msra.mxu0 %v848
        %1071 = vmatprep.subr.mxu0 %v851
        %1072 = vmatpush1.msra.mxu0 %v850
        %1073 = vmatprep.subr.mxu0 %v853
        %1074 = vmatpush1.msra.mxu0 %v852
        %1075 = vmatprep.subr.mxu0 %v855
        %1076 = vmatpush1.msra.mxu0 %v854
        %1077 = vmatprep.subr.mxu0 %v857
        %1078 = vmatpush1.msra.mxu0 %v856
        %1079 = vmatprep.subr.mxu0 %v859
        %1080 = vmatpush1.msra.mxu0 %v858
        %1081 = vmatprep.subr.mxu0 %v861
        %1082 = vmatpush1.msra.mxu0 %v860
        %1083 = vmatprep.subr.mxu0 %v863
        %1084 = vmatpush1.msra.mxu0 %v862
        %1085 = vmatprep.subr.mxu0 %v865
        %1086 = vmatpush1.msra.mxu0 %v864
        %1087 = vmatprep.subr.mxu0 %v867
        %1088 = vmatpush1.msra.mxu0 %v866
        %1089 = vmatprep.subr.mxu0 %v869
        %1090 = vmatpush1.msra.mxu0 %v868
        %1091 = vmatprep.subr.mxu0 %v871
        %1092 = vmatpush1.msra.mxu0 %v870
        %1093 = vmatprep.subr.mxu0 %v873
        %1094 = vmatpush1.msra.mxu0 %v872
        %1095 = vmatprep.subr.mxu0 %v875
        %1096 = vmatpush1.msra.mxu0 %v874
        %1097 = vmatprep.subr.mxu0 %v877
        %1098 = vmatpush1.msra.mxu0 %v876
        %1099 = vmatprep.subr.mxu0 %v879
        %1100 = vmatpush1.msra.mxu0 %v878
        %1101 = vmatprep.subr.mxu0 %v881
        %1102 = vmatpush1.msra.mxu0 %v880
        %1103 = vmatprep.subr.mxu0 %v883
        %1104 = vmatpush1.msra.mxu0 %v882
        %1105 = vmatprep.subr.mxu0 %v885
        %1106 = vmatpush1.msra.mxu0 %v884
        %1107 = vmatprep.subr.mxu0 %v887
        %1108 = vmatpush1.msra.mxu0 %v886
        %1109 = vmatprep.subr.mxu0 %v889
        %1110 = vmatpush1.msra.mxu0 %v888
        %1111 = vmatprep.subr.mxu0 %v891
        %1112 = vmatpush1.msra.mxu0 %v890
        %1113 = vmatprep.subr.mxu0 %v893
        %1114 = vmatpush1.msra.mxu0 %v892
        %1115 = vmatprep.mubr.f32.mxu0 %v757
        %1116 = vmatmul.mubr.f32.gmra.mrb[0].mxu0 %v756
        %v1117 = vpop.f32.mrb[0].mxu0
        %v1118 = vadd.f32 %v1005, %v1117
        %v1119 = vpop.f32.mrb[0].mxu0
        %v1120 = vadd.f32 %v1007, %v1119
        %1121 = vmatprep.mubr.f32.mxu0 %v758
        %1122 = vmatmul.mubr.f32.gmra.mrb[0].mxu0 %v757
        %v1123 = vpop.f32.mrb[0].mxu0
        %v1124 = vadd.f32 %v1011, %v1123
        %v1125 = vpop.f32.mrb[0].mxu0
        %v1126 = vadd.f32 %v1013, %v1125
        %1127 = vmatprep.mubr.f32.mxu0 %v759
        %1128 = vmatmul.mubr.f32.gmra.mrb[0].mxu0 %v758
        %v1129 = vpop.f32.mrb[0].mxu0
        %v1130 = vadd.f32 %v1017, %v1129
        %v1131 = vpop.f32.mrb[0].mxu0
        %v1132 = vadd.f32 %v1019, %v1131
        %1133 = vmatprep.mubr.f32.mxu0 %v760
        %1134 = vmatmul.mubr.f32.gmra.mrb[0].mxu0 %v759
        %v1135 = vpop.f32.mrb[0].mxu0
        %v1136 = vadd.f32 %v1023, %v1135
        %v1137 = vpop.f32.mrb[0].mxu0
        %v1138 = vadd.f32 %v1025, %v1137
        %1139 = vmatprep.mubr.f32.mxu0 %v761
        %1140 = vmatmul.mubr.f32.gmra.mrb[0].mxu0 %v760
        %v1141 = vpop.f32.mrb[0].mxu0
        %v1142 = vadd.f32 %v1029, %v1141
        %v1143 = vpop.f32.mrb[0].mxu0
        %v1144 = vadd.f32 %v1031, %v1143
        %1145 = vmatprep.mubr.f32.mxu0 %v762
        %1146 = vmatmul.mubr.f32.gmra.mrb[0].mxu0 %v761
        %v1147 = vpop.f32.mrb[0].mxu0
        %v1148 = vadd.f32 %v1035, %v1147
        %v1149 = vpop.f32.mrb[0].mxu0
        %v1150 = vadd.f32 %v1037, %v1149
        %1151 = vmatprep.mubr.f32.mxu0 %v763
        %1152 = vmatmul.mubr.f32.gmra.mrb[0].mxu0 %v762
        %v1153 = vpop.f32.mrb[0].mxu0
        %v1154 = vadd.f32 %v1041, %v1153
        %v1155 = vpop.f32.mrb[0].mxu0
        %v1156 = vadd.f32 %v1043, %v1155
        %1157 = vmatprep.mubr.f32.mxu0 %v764
        %1158 = vmatmul.mubr.f32.gmra.mrb[0].mxu0 %v763
        %v1159 = vpop.f32.mrb[0].mxu0
        %v1160 = vadd.f32 %v1047, %v1159
        %v1161 = vpop.f32.mrb[0].mxu0
        %v1162 = vadd.f32 %v1049, %v1161
        %1163 = vdwg.mxu0
        %1164 = vmatprep.subr.mxu0 %v895
        %1165 = vmatpush1.msra.mxu0 %v894
        %1166 = vmatprep.subr.mxu0 %v897
        %1167 = vmatpush1.msra.mxu0 %v896
        %1168 = vmatprep.subr.mxu0 %v899
        %1169 = vmatpush1.msra.mxu0 %v898
        %1170 = vmatprep.subr.mxu0 %v901
        %1171 = vmatpush1.msra.mxu0 %v900
        %1172 = vmatprep.subr.mxu0 %v903
        %1173 = vmatpush1.msra.mxu0 %v902
        %1174 = vmatprep.subr.mxu0 %v905
        %1175 = vmatpush1.msra.mxu0 %v904
        %1176 = vmatprep.subr.mxu0 %v907
        %1177 = vmatpush1.msra.mxu0 %v906
        %1178 = vmatprep.subr.mxu0 %v909
        %1179 = vmatpush1.msra.mxu0 %v908
        %1180 = vmatprep.subr.mxu0 %v911
        %1181 = vmatpush1.msra.mxu0 %v910
        %1182 = vmatprep.subr.mxu0 %v913
        %1183 = vmatpush1.msra.mxu0 %v912
        %1184 = vmatprep.subr.mxu0 %v915
        %1185 = vmatpush1.msra.mxu0 %v914
        %1186 = vmatprep.subr.mxu0 %v917
        %1187 = vmatpush1.msra.mxu0 %v916
        %1188 = vmatprep.subr.mxu0 %v919
        %1189 = vmatpush1.msra.mxu0 %v918
        %1190 = vmatprep.subr.mxu0 %v921
        %1191 = vmatpush1.msra.mxu0 %v920
        %1192 = vmatprep.subr.mxu0 %v923
        %1193 = vmatpush1.msra.mxu0 %v922
        %1194 = vmatprep.subr.mxu0 %v925
        %1195 = vmatpush1.msra.mxu0 %v924
        %1196 = vmatprep.subr.mxu0 0.0
        %1197 = vmatpush1.msra.mxu0 0.0
        %1198 = vmatprep.subr.mxu0 0.0
        %1199 = vmatpush1.msra.mxu0 0.0
        %1200 = vmatprep.subr.mxu0 0.0
        %1201 = vmatpush1.msra.mxu0 0.0
        %1202 = vmatprep.subr.mxu0 0.0
        %1203 = vmatpush1.msra.mxu0 0.0
        %1204 = vmatprep.subr.mxu0 0.0
        %1205 = vmatpush1.msra.mxu0 0.0
        %1206 = vmatprep.subr.mxu0 0.0
        %1207 = vmatpush1.msra.mxu0 0.0
        %1208 = vmatprep.subr.mxu0 0.0
        %1209 = vmatpush1.msra.mxu0 0.0
        %1210 = vmatprep.subr.mxu0 0.0
        %1211 = vmatpush1.msra.mxu0 0.0
        %1212 = vmatprep.subr.mxu0 0.0
        %1213 = vmatpush1.msra.mxu0 0.0
        %1214 = vmatprep.subr.mxu0 0.0
        %1215 = vmatpush1.msra.mxu0 0.0
        %1216 = vmatprep.subr.mxu0 0.0
        %1217 = vmatpush1.msra.mxu0 0.0
        %1218 = vmatprep.subr.mxu0 0.0
        %1219 = vmatpush1.msra.mxu0 0.0
        %1220 = vmatprep.subr.mxu0 0.0
        %1221 = vmatpush1.msra.mxu0 0.0
        %1222 = vmatprep.subr.mxu0 0.0
        %1223 = vmatpush1.msra.mxu0 0.0
        %1224 = vmatprep.subr.mxu0 0.0
        %1225 = vmatpush1.msra.mxu0 0.0
        %1226 = vmatprep.subr.mxu0 0.0
        %1227 = vmatpush1.msra.mxu0 0.0
        %1228 = vmatprep.mubr.f32.mxu0 0.0
        %1229 = vmatmul.mubr.f32.gmra.mrb[0].mxu0 %v758
        %v1230 = vpop.f32.mrb[0].mxu0
        %v1231 = vadd.f32 %v1118, %v1230
        %v1232 = vpop.f32.mrb[0].mxu0
        %v1233 = vadd.f32 %v1120, %v1232
        %1234 = vmatprep.mubr.f32.mxu0 0.0
        %1235 = vmatmul.mubr.f32.gmra.mrb[0].mxu0 %v759
        %v1236 = vpop.f32.mrb[0].mxu0
        %v1237 = vadd.f32 %v1124, %v1236
        %v1238 = vpop.f32.mrb[0].mxu0
        %v1239 = vadd.f32 %v1126, %v1238
        %1240 = vmatprep.mubr.f32.mxu0 0.0
        %1241 = vmatmul.mubr.f32.gmra.mrb[0].mxu0 %v760
        %v1242 = vpop.f32.mrb[0].mxu0
        %v1243 = vadd.f32 %v1130, %v1242
        %v1244 = vpop.f32.mrb[0].mxu0
        %v1245 = vadd.f32 %v1132, %v1244
        %1246 = vmatprep.mubr.f32.mxu0 0.0
        %1247 = vmatmul.mubr.f32.gmra.mrb[0].mxu0 %v761
        %v1248 = vpop.f32.mrb[0].mxu0
        %v1249 = vadd.f32 %v1136, %v1248
        %v1250 = vpop.f32.mrb[0].mxu0
        %v1251 = vadd.f32 %v1138, %v1250
        %1252 = vmatprep.mubr.f32.mxu0 0.0
        %1253 = vmatmul.mubr.f32.gmra.mrb[0].mxu0 %v762
        %v1254 = vpop.f32.mrb[0].mxu0
        %v1255 = vadd.f32 %v1142, %v1254
        %v1256 = vpop.f32.mrb[0].mxu0
        %v1257 = vadd.f32 %v1144, %v1256
        %1258 = vmatprep.mubr.f32.mxu0 0.0
        %1259 = vmatmul.mubr.f32.gmra.mrb[0].mxu0 %v763
        %v1260 = vpop.f32.mrb[0].mxu0
        %v1261 = vadd.f32 %v1148, %v1260
        %v1262 = vpop.f32.mrb[0].mxu0
        %v1263 = vadd.f32 %v1150, %v1262
        %1264 = vmatprep.mubr.f32.mxu0 0.0
        %1265 = vmatmul.mubr.f32.gmra.mrb[0].mxu0 %v764
        %v1266 = vpop.f32.mrb[0].mxu0
        %v1267 = vadd.f32 %v1154, %v1266
        %v1268 = vpop.f32.mrb[0].mxu0
        %v1269 = vadd.f32 %v1156, %v1268
        %1270 = vmatprep.mubr.f32.mxu0 0.0
        %1271 = vmatmul.mubr.f32.gmra.mrb[0].mxu0 %v765
        %v1272 = vpop.f32.mrb[0].mxu0
        %v1273 = vadd.f32 %v1160, %v1272
        %v1274 = vpop.f32.mrb[0].mxu0
        %v1275 = vadd.f32 %v1162, %v1274
        %1276 = vdwg.mxu0
        %v1277 = vmax.f32 %v1231, %v1233
        %v1278 = vmax.f32 %v1237, %v1239
        %v1279 = vmax.f32 %v1243, %v1245
        %v1280 = vmax.f32 %v1249, %v1251
        %v1281 = vmax.f32 %v1255, %v1257
        %v1282 = vmax.f32 %v1261, %v1263
        %v1283 = vmax.f32 %v1267, %v1269
        %v1284 = vmax.f32 %v1273, %v1275
        %v1285 = vmax.f32 %v1277, %v1278
        %v1286 = vmax.f32 %v1279, %v1280
        %v1287 = vmax.f32 %v1281, %v1282
        %v1288 = vmax.f32 %v1283, %v1284
        %v1289 = vmax.f32 %v1285, 0.0
        %v1290 = vmax.f32 %v1286, 0.0
        %v1291 = vmax.f32 %v1287, 0.0
        %v1292 = vmax.f32 %v1288, 0.0
        %v1293 = vld [vmem:[%s5] sm:$0xff]
        %v1294 = vld [vmem:[%s5 + $0x8] sm:$0xff]
        %v1295 = vld [vmem:[%s5 + $0x10] sm:$0xff]
        %v1296 = vld [vmem:[%s5 + $0x18] sm:$0xff]
        %v1297 = vld [vmem:[%s5 + $0x20] sm:$0xff]
        %v1298 = vld [vmem:[%s5 + $0x28] sm:$0xff]
        %v1299 = vld [vmem:[%s5 + $0x30] sm:$0xff]
        %v1300 = vld [vmem:[%s5 + $0x38] sm:$0xff]
        %v1301 = vld [vmem:[%s5 + $0x40] sm:$0xff]
        %v1302 = vld [vmem:[%s5 + $0x48] sm:$0xff]
        %v1303 = vld [vmem:[%s5 + $0x50] sm:$0xff]
        %v1304 = vld [vmem:[%s5 + $0x58] sm:$0xff]
        %v1305 = vld [vmem:[%s5 + $0x60] sm:$0xff]
        %v1306 = vld [vmem:[%s5 + $0x68] sm:$0xff]
        %v1307 = vld [vmem:[%s5 + $0x70] sm:$0xff]
        %v1308 = vld [vmem:[%s5 + $0x78] sm:$0xff]
        %v1309 = vld [vmem:[%s5 + $0x80] sm:$0xff]
        %v1310 = vld [vmem:[%s5 + $0x88] sm:$0xff]
        %v1311 = vld [vmem:[%s5 + $0x90] sm:$0xff]
        %v1312 = vld [vmem:[%s5 + $0x98] sm:$0xff]
        %v1313 = vld [vmem:[%s5 + $0xa0] sm:$0xff]
        %v1314 = vld [vmem:[%s5 + $0xa8] sm:$0xff]
        %v1315 = vld [vmem:[%s5 + $0xb0] sm:$0xff]
        %v1316 = vld [vmem:[%s5 + $0xb8] sm:$0xff]
        %v1317 = vld [vmem:[%s5 + $0xc0] sm:$0xff]
        %v1318 = vld [vmem:[%s5 + $0xc8] sm:$0xff]
        %v1319 = vld [vmem:[%s5 + $0xd0] sm:$0xff]
        %v1320 = vld [vmem:[%s5 + $0xd8] sm:$0xff]
        %v1321 = vld [vmem:[%s5 + $0xe0] sm:$0xff]
        %v1322 = vld [vmem:[%s5 + $0xe8] sm:$0xff]
        %v1323 = vld [vmem:[%s5 + $0xf0] sm:$0xff]
        %v1324 = vld [vmem:[%s5 + $0xf8] sm:$0xff]
        %v1325 = vld [vmem:[%s5 + $0x100] sm:$0xff]
        %v1326 = vld [vmem:[%s5 + $0x108] sm:$0xff]
        %v1327 = vld [vmem:[%s5 + $0x110] sm:$0xff]
        %v1328 = vld [vmem:[%s5 + $0x118] sm:$0xff]
        %v1329 = vld [vmem:[%s5 + $0x120] sm:$0xff]
        %v1330 = vld [vmem:[%s5 + $0x128] sm:$0xff]
        %v1331 = vld [vmem:[%s5 + $0x130] sm:$0xff]
        %v1332 = vld [vmem:[%s5 + $0x138] sm:$0xff]
        %v1333 = vld [vmem:[%s5 + $0x140] sm:$0xff]
        %v1334 = vld [vmem:[%s5 + $0x148] sm:$0xff]
        %v1335 = vld [vmem:[%s5 + $0x150] sm:$0xff]
        %v1336 = vld [vmem:[%s5 + $0x158] sm:$0xff]
        %v1337 = vld [vmem:[%s5 + $0x160] sm:$0xff]
        %v1338 = vld [vmem:[%s5 + $0x168] sm:$0xff]
        %v1339 = vld [vmem:[%s5 + $0x170] sm:$0xff]
        %v1340 = vld [vmem:[%s5 + $0x178] sm:$0xff]
        %v1341 = vld [vmem:[%s5 + $0x180] sm:$0xff]
        %v1342 = vld [vmem:[%s5 + $0x188] sm:$0xff]
        %v1343 = vld [vmem:[%s5 + $0x190] sm:$0xff]
        %v1344 = vld [vmem:[%s5 + $0x198] sm:$0xff]
        %v1345 = vld [vmem:[%s5 + $0x1a0] sm:$0xff]
        %v1346 = vld [vmem:[%s5 + $0x1a8] sm:$0xff]
        %v1347 = vld [vmem:[%s5 + $0x1b0] sm:$0xff]
        %v1348 = vld [vmem:[%s5 + $0x1b8] sm:$0xff]
        %v1349 = vld [vmem:[%s5 + $0x1c0] sm:$0xff]
        %v1350 = vld [vmem:[%s5 + $0x1c8] sm:$0xff]
        %v1351 = vld [vmem:[%s5 + $0x1d0] sm:$0xff]
        %v1352 = vld [vmem:[%s5 + $0x1d8] sm:$0xff]
        %v1353 = vld [vmem:[%s5 + $0x1e0] sm:$0xff]
        %v1354 = vld [vmem:[%s5 + $0x1e8] sm:$0xff]
        %v1355 = vld [vmem:[%s5 + $0x1f0] sm:$0xff]
        %v1356 = vld [vmem:[%s5 + $0x1f8] sm:$0xff]
        %v1357 = vld [vmem:[%s6] sm:$0x1]
        %v1359 = vlaneseq
        %v1360 = vshrl.u32 %v1359, 7
        %v1361 = vsub.s32 0, %v1360
        %v1362 = vrot.slane %v1357, %v1361
        %1364 = vmatprep.subr.mxu0 0.0
        %1365 = vmatpush1.msra.mxu0 %v1293
        %1366 = vmatprep.subr.mxu0 0.0
        %1367 = vmatpush1.msra.mxu0 %v1294
        %1368 = vmatprep.subr.mxu0 0.0
        %1369 = vmatpush1.msra.mxu0 %v1295
        %1370 = vmatprep.subr.mxu0 0.0
        %1371 = vmatpush1.msra.mxu0 %v1296
        %1372 = vmatprep.subr.mxu0 0.0
        %1373 = vmatpush1.msra.mxu0 %v1297
        %1374 = vmatprep.subr.mxu0 0.0
        %1375 = vmatpush1.msra.mxu0 %v1298
        %1376 = vmatprep.subr.mxu0 0.0
        %1377 = vmatpush1.msra.mxu0 %v1299
        %1378 = vmatprep.subr.mxu0 0.0
        %1379 = vmatpush1.msra.mxu0 %v1300
        %1380 = vmatprep.subr.mxu0 0.0
        %1381 = vmatpush1.msra.mxu0 %v1301
        %1382 = vmatprep.subr.mxu0 0.0
        %1383 = vmatpush1.msra.mxu0 %v1302
        %1384 = vmatprep.subr.mxu0 0.0
        %1385 = vmatpush1.msra.mxu0 %v1303
        %1386 = vmatprep.subr.mxu0 0.0
        %1387 = vmatpush1.msra.mxu0 %v1304
        %1388 = vmatprep.subr.mxu0 0.0
        %1389 = vmatpush1.msra.mxu0 %v1305
        %1390 = vmatprep.subr.mxu0 0.0
        %1391 = vmatpush1.msra.mxu0 %v1306
        %1392 = vmatprep.subr.mxu0 0.0
        %1393 = vmatpush1.msra.mxu0 %v1307
        %1394 = vmatprep.subr.mxu0 0.0
        %1395 = vmatpush1.msra.mxu0 %v1308
        %1396 = vmatprep.subr.mxu0 0.0
        %1397 = vmatpush1.msra.mxu0 %v1309
        %1398 = vmatprep.subr.mxu0 0.0
        %1399 = vmatpush1.msra.mxu0 %v1310
        %1400 = vmatprep.subr.mxu0 0.0
        %1401 = vmatpush1.msra.mxu0 %v1311
        %1402 = vmatprep.subr.mxu0 0.0
        %1403 = vmatpush1.msra.mxu0 %v1312
        %1404 = vmatprep.subr.mxu0 0.0
        %1405 = vmatpush1.msra.mxu0 %v1313
        %1406 = vmatprep.subr.mxu0 0.0
        %1407 = vmatpush1.msra.mxu0 %v1314
        %1408 = vmatprep.subr.mxu0 0.0
        %1409 = vmatpush1.msra.mxu0 %v1315
        %1410 = vmatprep.subr.mxu0 0.0
        %1411 = vmatpush1.msra.mxu0 %v1316
        %1412 = vmatprep.subr.mxu0 0.0
        %1413 = vmatpush1.msra.mxu0 %v1317
        %1414 = vmatprep.subr.mxu0 0.0
        %1415 = vmatpush1.msra.mxu0 %v1318
        %1416 = vmatprep.subr.mxu0 0.0
        %1417 = vmatpush1.msra.mxu0 %v1319
        %1418 = vmatprep.subr.mxu0 0.0
        %1419 = vmatpush1.msra.mxu0 %v1320
        %1420 = vmatprep.subr.mxu0 0.0
        %1421 = vmatpush1.msra.mxu0 %v1321
        %1422 = vmatprep.subr.mxu0 0.0
        %1423 = vmatpush1.msra.mxu0 %v1322
        %1424 = vmatprep.subr.mxu0 0.0
        %1425 = vmatpush1.msra.mxu0 %v1323
        %1426 = vmatprep.subr.mxu0 0.0
        %1427 = vmatpush1.msra.mxu0 %v1324
        %1428 = vmatprep.mubr.f32.mxu0 %v1290
        %1429 = vmatmul.mubr.f32.gmra.mrb[0].mxu0 %v1289
        %v1430 = vpop.f32.mrb[0].mxu0
        %v1431 = vadd.f32 %v1362, %v1430
        %v1432 = vpop.f32.mrb[0].mxu0
        %1433 = vdwg.mxu0
        %1434 = vmatprep.subr.mxu0 0.0
        %1435 = vmatpush1.msra.mxu0 %v1325
        %1436 = vmatprep.subr.mxu0 0.0
        %1437 = vmatpush1.msra.mxu0 %v1326
        %1438 = vmatprep.subr.mxu0 0.0
        %1439 = vmatpush1.msra.mxu0 %v1327
        %1440 = vmatprep.subr.mxu0 0.0
        %1441 = vmatpush1.msra.mxu0 %v1328
        %1442 = vmatprep.subr.mxu0 0.0
        %1443 = vmatpush1.msra.mxu0 %v1329
        %1444 = vmatprep.subr.mxu0 0.0
        %1445 = vmatpush1.msra.mxu0 %v1330
        %1446 = vmatprep.subr.mxu0 0.0
        %1447 = vmatpush1.msra.mxu0 %v1331
        %1448 = vmatprep.subr.mxu0 0.0
        %1449 = vmatpush1.msra.mxu0 %v1332
        %1450 = vmatprep.subr.mxu0 0.0
        %1451 = vmatpush1.msra.mxu0 %v1333
        %1452 = vmatprep.subr.mxu0 0.0
        %1453 = vmatpush1.msra.mxu0 %v1334
        %1454 = vmatprep.subr.mxu0 0.0
        %1455 = vmatpush1.msra.mxu0 %v1335
        %1456 = vmatprep.subr.mxu0 0.0
        %1457 = vmatpush1.msra.mxu0 %v1336
        %1458 = vmatprep.subr.mxu0 0.0
        %1459 = vmatpush1.msra.mxu0 %v1337
        %1460 = vmatprep.subr.mxu0 0.0
        %1461 = vmatpush1.msra.mxu0 %v1338
        %1462 = vmatprep.subr.mxu0 0.0
        %1463 = vmatpush1.msra.mxu0 %v1339
        %1464 = vmatprep.subr.mxu0 0.0
        %1465 = vmatpush1.msra.mxu0 %v1340
        %1466 = vmatprep.subr.mxu0 0.0
        %1467 = vmatpush1.msra.mxu0 %v1341
        %1468 = vmatprep.subr.mxu0 0.0
        %1469 = vmatpush1.msra.mxu0 %v1342
        %1470 = vmatprep.subr.mxu0 0.0
        %1471 = vmatpush1.msra.mxu0 %v1343
        %1472 = vmatprep.subr.mxu0 0.0
        %1473 = vmatpush1.msra.mxu0 %v1344
        %1474 = vmatprep.subr.mxu0 0.0
        %1475 = vmatpush1.msra.mxu0 %v1345
        %1476 = vmatprep.subr.mxu0 0.0
        %1477 = vmatpush1.msra.mxu0 %v1346
        %1478 = vmatprep.subr.mxu0 0.0
        %1479 = vmatpush1.msra.mxu0 %v1347
        %1480 = vmatprep.subr.mxu0 0.0
        %1481 = vmatpush1.msra.mxu0 %v1348
        %1482 = vmatprep.subr.mxu0 0.0
        %1483 = vmatpush1.msra.mxu0 %v1349
        %1484 = vmatprep.subr.mxu0 0.0
        %1485 = vmatpush1.msra.mxu0 %v1350
        %1486 = vmatprep.subr.mxu0 0.0
        %1487 = vmatpush1.msra.mxu0 %v1351
        %1488 = vmatprep.subr.mxu0 0.0
        %1489 = vmatpush1.msra.mxu0 %v1352
        %1490 = vmatprep.subr.mxu0 0.0
        %1491 = vmatpush1.msra.mxu0 %v1353
        %1492 = vmatprep.subr.mxu0 0.0
        %1493 = vmatpush1.msra.mxu0 %v1354
        %1494 = vmatprep.subr.mxu0 0.0
        %1495 = vmatpush1.msra.mxu0 %v1355
        %1496 = vmatprep.subr.mxu0 0.0
        %1497 = vmatpush1.msra.mxu0 %v1356
        %1498 = vmatprep.mubr.f32.mxu0 %v1292
        %1499 = vmatmul.mubr.f32.gmra.mrb[0].mxu0 %v1291
        %v1500 = vpop.f32.mrb[0].mxu0
        %v1501 = vadd.f32 %v1431, %v1500
        %v1502 = vpop.f32.mrb[0].mxu0
        %1503 = vdwg.mxu0
        %v1504 = vmax.f32 %v1501, 0.0
        %v1505 = vld [vmem:[%s7] sm:$0xff]
        %v1506 = vld [vmem:[%s7 + $0x8] sm:$0xff]
        %v1507 = vld [vmem:[%s7 + $0x10] sm:$0xff]
        %v1508 = vld [vmem:[%s7 + $0x18] sm:$0xff]
        %v1509 = vld [vmem:[%s7 + $0x20] sm:$0xff]
        %v1510 = vld [vmem:[%s7 + $0x28] sm:$0xff]
        %v1511 = vld [vmem:[%s7 + $0x30] sm:$0xff]
        %v1512 = vld [vmem:[%s7 + $0x38] sm:$0xff]
        %v1513 = vld [vmem:[%s7 + $0x40] sm:$0xff]
        %v1514 = vld [vmem:[%s7 + $0x48] sm:$0xff]
        %v1515 = vld [vmem:[%s7 + $0x50] sm:$0xff]
        %v1516 = vld [vmem:[%s7 + $0x58] sm:$0xff]
        %v1517 = vld [vmem:[%s7 + $0x60] sm:$0xff]
        %v1518 = vld [vmem:[%s7 + $0x68] sm:$0xff]
        %v1519 = vld [vmem:[%s7 + $0x70] sm:$0xff]
        %v1520 = vld [vmem:[%s7 + $0x78] sm:$0xff]
        %v1521 = vld [vmem:[%s8] sm:$0x1]
        %v1523 = vlaneseq
        %v1524 = vshrl.u32 %v1523, 7
        %v1525 = vsub.s32 0, %v1524
        %v1526 = vrot.slane %v1521, %v1525
        %1528 = vmatprep.subr.mxu0 0.0
        %1529 = vmatpush1.msra.mxu0 %v1505
        %1530 = vmatprep.subr.mxu0 0.0
        %1531 = vmatpush1.msra.mxu0 %v1506
        %1532 = vmatprep.subr.mxu0 0.0
        %1533 = vmatpush1.msra.mxu0 %v1507
        %1534 = vmatprep.subr.mxu0 0.0
        %1535 = vmatpush1.msra.mxu0 %v1508
        %1536 = vmatprep.subr.mxu0 0.0
        %1537 = vmatpush1.msra.mxu0 %v1509
        %1538 = vmatprep.subr.mxu0 0.0
        %1539 = vmatpush1.msra.mxu0 %v1510
        %1540 = vmatprep.subr.mxu0 0.0
        %1541 = vmatpush1.msra.mxu0 %v1511
        %1542 = vmatprep.subr.mxu0 0.0
        %1543 = vmatpush1.msra.mxu0 %v1512
        %1544 = vmatprep.subr.mxu0 0.0
        %1545 = vmatpush1.msra.mxu0 %v1513
        %1546 = vmatprep.subr.mxu0 0.0
        %1547 = vmatpush1.msra.mxu0 %v1514
        %1548 = vmatprep.subr.mxu0 0.0
        %1549 = vmatpush1.msra.mxu0 %v1515
        %1550 = vmatprep.subr.mxu0 0.0
        %1551 = vmatpush1.msra.mxu0 %v1516
        %1552 = vmatprep.subr.mxu0 0.0
        %1553 = vmatpush1.msra.mxu0 %v1517
        %1554 = vmatprep.subr.mxu0 0.0
        %1555 = vmatpush1.msra.mxu0 %v1518
        %1556 = vmatprep.subr.mxu0 0.0
        %1557 = vmatpush1.msra.mxu0 %v1519
        %1558 = vmatprep.subr.mxu0 0.0
        %1559 = vmatpush1.msra.mxu0 %v1520
        %1560 = vmatprep.subr.mxu0 0.0
        %1561 = vmatpush1.msra.mxu0 0.0
        %1562 = vmatprep.subr.mxu0 0.0
        %1563 = vmatpush1.msra.mxu0 0.0
        %1564 = vmatprep.subr.mxu0 0.0
        %1565 = vmatpush1.msra.mxu0 0.0
        %1566 = vmatprep.subr.mxu0 0.0
        %1567 = vmatpush1.msra.mxu0 0.0
        %1568 = vmatprep.subr.mxu0 0.0
        %1569 = vmatpush1.msra.mxu0 0.0
        %1570 = vmatprep.subr.mxu0 0.0
        %1571 = vmatpush1.msra.mxu0 0.0
        %1572 = vmatprep.subr.mxu0 0.0
        %1573 = vmatpush1.msra.mxu0 0.0
        %1574 = vmatprep.subr.mxu0 0.0
        %1575 = vmatpush1.msra.mxu0 0.0
        %1576 = vmatprep.subr.mxu0 0.0
        %1577 = vmatpush1.msra.mxu0 0.0
        %1578 = vmatprep.subr.mxu0 0.0
        %1579 = vmatpush1.msra.mxu0 0.0
        %1580 = vmatprep.subr.mxu0 0.0
        %1581 = vmatpush1.msra.mxu0 0.0
        %1582 = vmatprep.subr.mxu0 0.0
        %1583 = vmatpush1.msra.mxu0 0.0
        %1584 = vmatprep.subr.mxu0 0.0
        %1585 = vmatpush1.msra.mxu0 0.0
        %1586 = vmatprep.subr.mxu0 0.0
        %1587 = vmatpush1.msra.mxu0 0.0
        %1588 = vmatprep.subr.mxu0 0.0
        %1589 = vmatpush1.msra.mxu0 0.0
        %1590 = vmatprep.subr.mxu0 0.0
        %1591 = vmatpush1.msra.mxu0 0.0
        %1592 = vmatprep.mubr.f32.mxu0 0.0
        %1593 = vmatmul.mubr.f32.gmra.mrb[0].mxu0 %v1504
        %v1594 = vpop.f32.mrb[0].mxu0
        %v1595 = vadd.f32 %v1526, %v1594
        %v1596 = vpop.f32.mrb[0].mxu0
        %1597 = vdwg.mxu0
        %1598 = vmax.xlane.f32.xlu0 %v1595
        %v1599 = vpop.xlane.xlu0 %1598
        %v1600 = vsub.f32 %v1595, %v1599
        %v1601 = vmul.f32 %v1600, 1.442695
        %v1602 = vpow.pop %v1601
        %1603 = vadd.xlane.f32.xlu0 %v1602
        %v1604 = vpop.xlane.xlu0 %1603
        %v1605 = vlog2.pop %v1604
        %v1606 = vmul.f32 %v1605, 0.6931472
        %v1607 = vsub.f32 %v1600, %v1606
        %1608 = vst [vmem:[%s328] sm:$0xff] %v1607
        %s1609 = sand.u32 %s225, 1
        %s1610 = scalar_lea.sflag [#allocation3], %s1609
        %s1611 = sand.u32 %s225, 1
        %s1612 = smul.addr %s1611, 8
        %s1613 = scalar_lea.vmem [#allocation2], %s1612
        // Predicated region
        $region57: #{net_forward.1} parent=55 // pred_check
          %p1614 = pneg %p235
        $region58: #{net_forward.1} parent=55 // pred_check_branch
          %1616 = sbr.rel (%p1614) target = $region60
        $region59: #{net_forward.1} parent=55 // pred_region
          %s1618 = ssub.s32 128, 128
          %1619 = vsyncadd %s1610, %s1618
          %s1620 = smul.addr %s23, 128
          %s1621 = scalar_lea.hbm %s9, %s1620
          %s1623 = sshll.u32 %s1613, 4
          %s1624 = int_to_ptr.vmem [resolvable:$true] %s1623
          %1626 = dma.vmem_to_hbm [thread:$0]  %s1624, 128, %s1621, %s1610
        $region60: #{net_forward.1} parent=55 // pred_fallthru
          _
      $region56: #{net_forward.1} parent=5 // pred_fallthru
        _
      %p1627 = scmp.le.s32.totalorder 2, %s18
      // Predicated region
      $region61: #{net_forward.1} parent=5 // pred_check
        %p1628 = pneg %p1627
      $region62: #{net_forward.1} parent=5 // pred_check_branch
        %1630 = sbr.rel (%p1628) target = $region64
      $region63: #{net_forward.1} parent=5 // pred_region
        %s1631 = ssub.s32 %s18, 2
        // Predicated region
        $region65: #{net_forward.1} parent=63 // pred_check
          %p1632 = pneg %p241
        $region66: #{net_forward.1} parent=63 // pred_check_branch
          %1634 = sbr.rel (%p1632) target = $region68
        $region67: #{net_forward.1} parent=63 // pred_region
          %s1635 = sand.u32 %s226, 1
          %s1636 = scalar_lea.sflag [#allocation3], %s1635
          %s1637 = sand.u32 %s226, 1
          %s1638 = smul.addr %s1637, 8
          %s1639 = scalar_lea.vmem [#allocation2], %s1638
          %1640 = dma.done %s1636, 128
        $region68: #{net_forward.1} parent=63 // pred_fallthru
          _
      $region64: #{net_forward.1} parent=5 // pred_fallthru
        _
    $region6: #{net_forward.1} parent=1 // loop_footer
      %s22 = sadd.s32 1, %s18
    $region7: #{net_forward.1} parent=1 // loop_footer_branch
      %17 = sbr.rel target = $region3
    $region8: #{net_forward.1} parent=1 // loop_exit
      _
    %1641 = vsyncpa [#allocation3], 1
    %s1642 = scalar_lea.sflag [#allocation3], 1
    %1643 = vsyncpa %s1642, 1

</llo_original>
